<compile_context>
chip_gen: v7x
topology: tpu7x:2x2x1
jax: 0.10.0
libtpu: 0.0.40
codegen_flags: <defaults>
</compile_context>

<pallas_src>
import jax
import jax.numpy as jnp
from jax.experimental import pallas as pl
from jax.experimental.pallas import tpu as pltpu

SETTING = (3, 6, 12, 18)
NEG_SLOPE = 0.1
EPS = 1e-5
SPATIAL_CHS = 80
# MXU input dtype.  f32 keeps the check against the f32 reference at 2e-4;
# flip to jnp.bfloat16 for production channel counts (accumulation stays f32
# via preferred_element_type).  Keep elementwise math f32 (v5e has no bf16 VPU).
MXU_IN_DTYPE = jnp.float32


def _leaky(v):
    return jnp.where(v > 0, v, NEG_SLOPE * v)


# ------------------------------ fused kernel --------------------------------

def _make_rfblock_kernel(H, W, Cin, C, setting, Cpad, mask_index):
    nb = len(setting)
    HW = H * W

    def kernel(x_ref, scsh_dn_ref, w_dn_ref, sc1_ref, sh1_ref, w31_ref,
               sc2_ref, sh2_ref, w13_ref, w33_ref, scf_ref, shf_ref,
               wf_ref, wmask_ref, o_ref):
        f32 = jnp.float32
        wm = wmask_ref[...]                               # (n_mags, 2, HW)

        def edge_mask(s, positive):
            # per-image-row validity mask for a W-direction shift of +/- s
            row = 1 if positive else 0
            return wm[mask_index[s], row:row + 1, :]      # (1, HW)

        def shift_pix(y, dp):
            # z[:, p] = y[:, p + dp], zero-filled where p + dp is outside [0, HW)
            if dp == 0:
                return y
            if abs(dp) >= HW:
                return jnp.zeros_like(y)
            pad = jnp.zeros((y.shape[0], abs(dp)), f32)
            if dp > 0:
                return jnp.concatenate([y[:, dp:], pad], axis=1)
            return jnp.concatenate([pad, y[:, :HW + dp]], axis=1)

        def shift_w(y, s):
            # shift along the image W axis, with per-row zero edges
            return shift_pix(y, s) * edge_mask(abs(s), s > 0)

        def bnact(y, sc, sh, i):
            return _leaky(y * sc[i] + sh[i])

        # ---- down_chs: BN+act -> 1x1 conv on the MXU (stays in VMEM) -------
        sdn = scsh_dn_ref[...]
        y0 = _leaky(x_ref[...] * sdn[0] + sdn[1])                  # (Cin, HW)
        down = jnp.dot(w_dn_ref[...].astype(MXU_IN_DTYPE),
                       y0.astype(MXU_IN_DTYPE),
                       preferred_element_type=f32)                 # (C, HW)

        sc1 = sc1_ref[...]; sh1 = sh1_ref[...]
        sc2 = sc2_ref[...]; sh2 = sh2_ref[...]
        scf = scf_ref[...]; shf = shf_ref[...]
        w31 = w31_ref[...]; w13 = w13_ref[...]; w33 = w33_ref[...]

        acts = []

        # ---- dilated-feature branches (all read the in-VMEM `down`) --------
        for i, d in enumerate(setting):
            y1 = bnact(down, sc1, sh1, i)
            # depthwise (3,1), dilation (d,1), padding (d,0): row shifts (+-d*W)
            t = w31[i, 1] * y1
            if d < H:                                  # taps outside image are zero
                t = (t + w31[i, 0] * shift_pix(y1, -d * W)
                       + w31[i, 2] * shift_pix(y1, d * W))
            y2 = bnact(t, sc2, sh2, i)
            # depthwise (1,3), dilation (1,d), padding (0,d): lane shifts + edge mask
            t = w13[i, 1] * y2
            if d < W:
                t = t + w13[i, 0] * shift_w(y2, -d) + w13[i, 2] * shift_w(y2, d)
            acts.append(bnact(t, scf, shf, i))

        # ---- spatial branch: BN+act -> depthwise 3x3 -> BN+act -------------
        ys = bnact(down, sc1, sh1, nb)
        terms = []
        for ki in range(3):
            for kj in range(3):
                dp = (ki - 1) * W + (kj - 1)
                t = shift_pix(ys, dp)
                if kj != 1:
                    t = t * edge_mask(1, kj == 2)
                terms.append(w33[3 * ki + kj] * t)
        s = terms[0]
        for t in terms[1:]:
            s = s + t
        acts.append(bnact(s, scf, shf, nb))

        # ---- GAP branch: BN+act -> per-channel mean -> broadcast -----------
        # (bilinear upsample of a 1x1 map == constant broadcast)
        yg = bnact(down, sc1, sh1, nb + 1)
        g = jnp.sum(yg, axis=1, keepdims=True) * (1.0 / HW)        # (C, 1)
        acts.append(jnp.broadcast_to(g, (C, HW)))

        # ---- merged final 1x1 convs: ONE K=(nb+2)*C MXU contraction --------
        lhs = jnp.concatenate(acts, axis=0)                        # ((nb+2)*C, HW)
        o_ref[...] = jnp.dot(wf_ref[...].astype(MXU_IN_DTYPE),
                             lhs.astype(MXU_IN_DTYPE),
                             preferred_element_type=f32).astype(o_ref.dtype)

    return kernel


# ------------------------------- wrappers ------------------------------------

def _pack_params(p, Cin, C, W, HW, Cpad, mask_mags):
    nb = len(SETTING)
    br = p['branches']
    f32 = jnp.float32

    def col(v):
        return v.reshape(-1, 1)

    scsh_dn = jnp.stack([col(p['bn_down'][0]), col(p['bn_down'][1])])   # (2, Cin, 1)
    w_dn_t = p['w_down'].T                                              # (C, Cin)

    sc1 = jnp.stack([col(br[i]['bn1'][0]) for i in range(nb)]
                    + [col(p['bn_sp1'][0]), col(p['bn_gap'][0])])       # (nb+2, C, 1)
    sh1 = jnp.stack([col(br[i]['bn1'][1]) for i in range(nb)]
                    + [col(p['bn_sp1'][1]), col(p['bn_gap'][1])])
    w31 = jnp.stack([br[i]['w31'] for i in range(nb)])[..., None]       # (nb, 3, C, 1)
    sc2 = jnp.stack([col(br[i]['bn2'][0]) for i in range(nb)])          # (nb, C, 1)
    sh2 = jnp.stack([col(br[i]['bn2'][1]) for i in range(nb)])
    w13 = jnp.stack([br[i]['w13'] for i in range(nb)])[..., None]       # (nb, 3, C, 1)
    w33 = p['w_dw33'][..., None]                                        # (9, C, 1)
    scf = jnp.stack([col(br[i]['bn3'][0]) for i in range(nb)] + [col(p['bn_sp2'][0])])
    shf = jnp.stack([col(br[i]['bn3'][1]) for i in range(nb)] + [col(p['bn_sp2'][1])])

    # Merged final 1x1 conv weights, transposed for (Cpad, K) @ (K, HW):
    #   output rows [0, nb*C)        : per-branch w11
    #   output rows [nb*C, (nb+1)*C) : GAP placement (identity)
    #   output rows [(nb+1)*C, Ctot) : spatial w_sp (80 wide)
    #   output rows [Ctot, Cpad)     : zero padding (lane-dense store)
    wf = jnp.zeros(((nb + 2) * C, Cpad), f32)
    for i in range(nb):
        wf = wf.at[i * C:(i + 1) * C, i * C:(i + 1) * C].set(br[i]['w11'])
    wf = wf.at[nb * C:(nb + 1) * C,
               (nb + 1) * C:(nb + 1) * C + SPATIAL_CHS].set(p['w_sp'])
    wf = wf.at[(nb + 1) * C:(nb + 2) * C,
               nb * C:(nb + 1) * C].set(jnp.eye(C, dtype=f32))
    wf_t = wf.T                                                         # (Cpad, (nb+2)*C)

    # Per-row validity masks for W-direction lane shifts (edge zero padding).
    wcoord = jnp.arange(HW, dtype=jnp.int32) % W
    rows = []
    for s in mask_mags:
        rows.append((wcoord >= s).astype(f32))            # negative shift (-s)
        rows.append((wcoord <= W - 1 - s).astype(f32))    # positive shift (+s)
    wmask = jnp.stack(rows).reshape(len(mask_mags), 2, HW)

    return (scsh_dn, w_dn_t, sc1, sh1, w31, sc2, sh2, w13, w33,
            scf, shf, wf_t, wmask)


def _full_spec(shape):
    zeros = (0,) * len(shape)
    return pl.BlockSpec(shape, lambda b: zeros)


def rfblock_forward(x_nchw, p):
    N, Cin, H, W = x_nchw.shape
    C = p['w_down'].shape[1]
    nb = len(SETTING)
    Ctot = nb * C + C + SPATIAL_CHS
    HW = H * W
    Cpad = ((Ctot + 127) // 128) * 128        # lane-dense padded output width

    mask_mags = sorted({1} | {d for d in SETTING if d < W})
    mask_index = {s: i for i, s in enumerate(mask_mags)}

    packed = _pack_params(p, Cin, C, W, HW, Cpad, mask_mags)
    kernel = _make_rfblock_kernel(H, W, Cin, C, SETTING, Cpad, mask_index)

    # Channel-major working layout: channels on sublanes, pixels on lanes.
    # NCHW -> (N, C, H*W) is a free contiguous reshape; no transpose anywhere.
    x_flat = x_nchw.reshape(N, Cin, HW)

    in_specs = [pl.BlockSpec((None, Cin, HW), lambda b: (b, 0, 0))]
    in_specs += [_full_spec(a.shape) for a in packed]

    flops = 2 * N * HW * (Cin * C + (nb + 2) * C * Cpad)
    bytes_accessed = 4 * (int(x_flat.size) + N * Cpad * HW
                          + sum(int(a.size) for a in packed))

    out = pl.pallas_call(
        kernel,
        out_shape=jax.ShapeDtypeStruct((N, Cpad, HW), jnp.float32),
        grid=(N,),
        in_specs=in_specs,
        out_specs=pl.BlockSpec((None, Cpad, HW), lambda b: (b, 0, 0)),
        compiler_params=pltpu.CompilerParams(
            dimension_semantics=("parallel",),        # megacore over batch
            vmem_limit_bytes=16 * 1024 * 1024),       # >>10x actual footprint
        cost_estimate=pl.CostEstimate(flops=flops, transcendentals=0,
                                      bytes_accessed=bytes_accessed),
    )(x_flat, *packed)
    # TODO(synk): for production-sized H*W, grid over (N, H-strips) with a
    # max-dilation halo and a two-pass GAP so blocks fit v7x's 64 MiB VMEM and
    # both TensorCores stay busy at batch 1.
    return out.reshape(N, Cpad, H, W)[:, :Ctot]       # already NCHW


# ------------------------------ parameter init -------------------------------

def init_params(key, in_chs, out_chs):
    keys = iter(jax.random.split(key, 256))

    def bn(c):
        # TODO(synk): BatchNorm uses inference-mode running stats folded into
        # (scale, shift); PyTorch training-mode batch statistics are not
        # reproduced.
        gamma = 1.0 + 0.1 * jax.random.normal(next(keys), (c,), jnp.float32)
        beta = 0.1 * jax.random.normal(next(keys), (c,), jnp.float32)
        mean = 0.1 * jax.random.normal(next(keys), (c,), jnp.float32)
        var = jax.random.uniform(next(keys), (c,), jnp.float32,
                                 minval=0.5, maxval=1.5)
        scale = gamma / jnp.sqrt(var + EPS)
        shift = beta - mean * scale
        return (scale, shift)

    def conv1x1(ci, co):
        return 0.2 * jax.random.normal(next(keys), (ci, co), jnp.float32)

    def dwconv(ntaps, c):
        return 0.2 * jax.random.normal(next(keys), (ntaps, c), jnp.float32)

    return {
        'bn_down': bn(in_chs),
        'w_down': conv1x1(in_chs, out_chs),
        'bn_sp1': bn(out_chs),
        'w_dw33': dwconv(9, out_chs),
        'bn_sp2': bn(out_chs),
        'w_sp': conv1x1(out_chs, SPATIAL_CHS),
        'bn_gap': bn(out_chs),
        'branches': [
            {'bn1': bn(out_chs), 'w31': dwconv(3, out_chs),
             'bn2': bn(out_chs), 'w13': dwconv(3, out_chs),
             'bn3': bn(out_chs), 'w11': conv1x1(out_chs, out_chs)}
            for _ in SETTING
        ],
    }


# ------------------------- pure-JAX reference check --------------------------

def _ref_dw(y, w, kh, kw, dh, dw, ph, pw):
    C = y.shape[-1]
    f = w.reshape(kh, kw, 1, C)
    return jax.lax.conv_general_dilated(
        y, f, window_strides=(1, 1), padding=[(ph, ph), (pw, pw)],
        rhs_dilation=(dh, dw),
        dimension_numbers=('NHWC', 'HWIO', 'NHWC'),
        feature_group_count=C)


def rfblock_reference(x_nchw, p):
    x = jnp.transpose(x_nchw, (0, 2, 3, 1))
    N, H, W, _ = x.shape

    def bnact(t, sc_sh):
        sc, sh = sc_sh
        return _leaky(t * sc + sh)

    down = jnp.einsum('nhwc,cd->nhwd', bnact(x, p['bn_down']), p['w_down'])
    C = down.shape[-1]
    s = _ref_dw(bnact(down, p['bn_sp1']), p['w_dw33'], 3, 3, 1, 1, 1, 1)
    spatial = jnp.einsum('nhwc,cd->nhwd', bnact(s, p['bn_sp2']), p['w_sp'])
    g = jnp.mean(bnact(down, p['bn_gap']), axis=(1, 2), keepdims=True)
    gap_up = jnp.broadcast_to(g, (N, H, W, C))
    feats = []
    for d, br in zip(SETTING, p['branches']):
        t = _ref_dw(bnact(down, br['bn1']), br['w31'], 3, 1, d, 1, d, 0)
        t = _ref_dw(bnact(t, br['bn2']), br['w13'], 1, 3, 1, d, 0, d)
        t = jnp.einsum('nhwc,cd->nhwd', bnact(t, br['bn3']), br['w11'])
        feats.append(t)
    out = jnp.concatenate(feats + [gap_up, spatial], axis=-1)
    return jnp.transpose(out, (0, 3, 1, 2))


# ---------------------------------- main -------------------------------------

if __name__ == "__main__":
    N, in_chs, out_chs, H, W = 2, 8, 8, 16, 16
    key = jax.random.PRNGKey(0)
    kp, kx = jax.random.split(key)
    params = init_params(kp, in_chs, out_chs)
    x = jax.random.normal(kx, (N, in_chs, H, W), jnp.float32)   # NCHW, like PyTorch

    fwd = jax.jit(rfblock_forward)
    out = jax.block_until_ready(fwd(x, params))

    expected_c = len(SETTING) * out_chs + out_chs + SPATIAL_CHS
    assert out.shape == (N, expected_c, H, W), out.shape

    ref = rfblock_reference(x, params)
    err = float(jnp.max(jnp.abs(out - ref)))
    assert err < 2e-4, f"max abs err {err}"

    print("KERNEL_OK")
</pallas_src>

<mosaic_0001>
module attributes {stable_mosaic.version = 11 : i64} {
  func.func @kernel(%arg0: i32, %arg1: memref<1x8x256xf32, #tpu.memory_space<vmem>>, %arg2: memref<2x8x1xf32, #tpu.memory_space<vmem>>, %arg3: memref<8x8xf32, #tpu.memory_space<vmem>>, %arg4: memref<6x8x1xf32, #tpu.memory_space<vmem>>, %arg5: memref<6x8x1xf32, #tpu.memory_space<vmem>>, %arg6: memref<4x3x8x1xf32, #tpu.memory_space<vmem>>, %arg7: memref<4x8x1xf32, #tpu.memory_space<vmem>>, %arg8: memref<4x8x1xf32, #tpu.memory_space<vmem>>, %arg9: memref<4x3x8x1xf32, #tpu.memory_space<vmem>>, %arg10: memref<9x8x1xf32, #tpu.memory_space<vmem>>, %arg11: memref<5x8x1xf32, #tpu.memory_space<vmem>>, %arg12: memref<5x8x1xf32, #tpu.memory_space<vmem>>, %arg13: memref<128x48xf32, #tpu.memory_space<vmem>>, %arg14: memref<4x2x256xf32, #tpu.memory_space<vmem>>, %arg15: memref<1x128x256xf32, #tpu.memory_space<vmem>>) attributes {dimension_semantics = [#tpu.dimension_semantics<parallel>], iteration_bounds = array<i64: 2>, scalar_prefetch = 0 : i64, scratch_operands = 0 : i64, tpu.core_type = #tpu.core_type<tc>, window_params = [{transform_indices = @transform_0, window_bounds = array<i64: 1, 8, 256>}, {pipeline_mode = #tpu.pipeline_mode<synchronous>, transform_indices = @transform_1, window_bounds = array<i64: 2, 8, 1>}, {pipeline_mode = #tpu.pipeline_mode<synchronous>, transform_indices = @transform_2, window_bounds = array<i64: 8, 8>}, {pipeline_mode = #tpu.pipeline_mode<synchronous>, transform_indices = @transform_3, window_bounds = array<i64: 6, 8, 1>}, {pipeline_mode = #tpu.pipeline_mode<synchronous>, transform_indices = @transform_4, window_bounds = array<i64: 6, 8, 1>}, {pipeline_mode = #tpu.pipeline_mode<synchronous>, transform_indices = @transform_5, window_bounds = array<i64: 4, 3, 8, 1>}, {pipeline_mode = #tpu.pipeline_mode<synchronous>, transform_indices = @transform_6, window_bounds = array<i64: 4, 8, 1>}, {pipeline_mode = #tpu.pipeline_mode<synchronous>, transform_indices = @transform_7, window_bounds = array<i64: 4, 8, 1>}, {pipeline_mode = #tpu.pipeline_mode<synchronous>, transform_indices = @transform_8, window_bounds = array<i64: 4, 3, 8, 1>}, {pipeline_mode = #tpu.pipeline_mode<synchronous>, transform_indices = @transform_9, window_bounds = array<i64: 9, 8, 1>}, {pipeline_mode = #tpu.pipeline_mode<synchronous>, transform_indices = @transform_10, window_bounds = array<i64: 5, 8, 1>}, {pipeline_mode = #tpu.pipeline_mode<synchronous>, transform_indices = @transform_11, window_bounds = array<i64: 5, 8, 1>}, {pipeline_mode = #tpu.pipeline_mode<synchronous>, transform_indices = @transform_12, window_bounds = array<i64: 128, 48>}, {pipeline_mode = #tpu.pipeline_mode<synchronous>, transform_indices = @transform_13, window_bounds = array<i64: 4, 2, 256>}, {transform_indices = @transform_14, window_bounds = array<i64: 1, 128, 256>}]} {
    %c0 = arith.constant 0 : index
    %c0_0 = arith.constant 0 : index
    %c0_1 = arith.constant 0 : index
    %0 = vector.load %arg14[%c0, %c0_0, %c0_1] : memref<4x2x256xf32, #tpu.memory_space<vmem>>, vector<4x2x256xf32>
    %c0_2 = arith.constant 0 : index
    %c0_3 = arith.constant 0 : index
    %c0_4 = arith.constant 0 : index
    %1 = vector.load %arg2[%c0_2, %c0_3, %c0_4] : memref<2x8x1xf32, #tpu.memory_space<vmem>>, vector<2x8x1xf32>
    %c0_5 = arith.constant 0 : index
    %c0_6 = arith.constant 0 : index
    %c0_7 = arith.constant 0 : index
    %2 = vector.load %arg1[%c0_5, %c0_6, %c0_7] : memref<1x8x256xf32, #tpu.memory_space<vmem>>, vector<1x8x256xf32>
    %3 = vector.shape_cast %2 : vector<1x8x256xf32> to vector<8x256xf32>
    %4 = vector.extract_strided_slice %1 {offsets = [0, 0, 0], sizes = [1, 8, 1], strides = [1, 1, 1]} : vector<2x8x1xf32> to vector<1x8x1xf32>
    %5 = vector.shape_cast %4 : vector<1x8x1xf32> to vector<8x1xf32>
    %6 = vector.broadcast %5 : vector<8x1xf32> to vector<8x256xf32>
    %7 = arith.mulf %3, %6 : vector<8x256xf32>
    %8 = vector.extract_strided_slice %1 {offsets = [1, 0, 0], sizes = [1, 8, 1], strides = [1, 1, 1]} : vector<2x8x1xf32> to vector<1x8x1xf32>
    %9 = vector.shape_cast %8 : vector<1x8x1xf32> to vector<8x1xf32>
    %10 = vector.broadcast %9 : vector<8x1xf32> to vector<8x256xf32>
    %11 = arith.addf %7, %10 : vector<8x256xf32>
    %cst = arith.constant 0.000000e+00 : f32
    %12 = vector.broadcast %cst : f32 to vector<8x256xf32>
    %13 = arith.cmpf ogt, %11, %12 : vector<8x256xf32>
    %cst_8 = arith.constant 1.000000e-01 : f32
    %14 = vector.broadcast %cst_8 : f32 to vector<8x256xf32>
    %15 = arith.mulf %14, %11 : vector<8x256xf32>
    %16 = arith.select %13, %11, %15 : vector<8x256xi1>, vector<8x256xf32>
    %c0_9 = arith.constant 0 : index
    %c0_10 = arith.constant 0 : index
    %17 = vector.load %arg3[%c0_9, %c0_10] : memref<8x8xf32, #tpu.memory_space<vmem>>, vector<8x8xf32>
    %cst_11 = arith.constant dense<0.000000e+00> : vector<8x256xf32>
    %18 = tpu.matmul %17, %16, %cst_11 {dimension_numbers = #tpu.dot_dimension_numbers<[1], [0], [0], [1], [0, 0, 1, 1], [], []>} : vector<8x8xf32>, vector<8x256xf32>, vector<8x256xf32> -> vector<8x256xf32>
    %c0_12 = arith.constant 0 : index
    %c0_13 = arith.constant 0 : index
    %c0_14 = arith.constant 0 : index
    %19 = vector.load %arg4[%c0_12, %c0_13, %c0_14] : memref<6x8x1xf32, #tpu.memory_space<vmem>>, vector<6x8x1xf32>
    %c0_15 = arith.constant 0 : index
    %c0_16 = arith.constant 0 : index
    %c0_17 = arith.constant 0 : index
    %20 = vector.load %arg5[%c0_15, %c0_16, %c0_17] : memref<6x8x1xf32, #tpu.memory_space<vmem>>, vector<6x8x1xf32>
    %c0_18 = arith.constant 0 : index
    %c0_19 = arith.constant 0 : index
    %c0_20 = arith.constant 0 : index
    %21 = vector.load %arg7[%c0_18, %c0_19, %c0_20] : memref<4x8x1xf32, #tpu.memory_space<vmem>>, vector<4x8x1xf32>
    %c0_21 = arith.constant 0 : index
    %c0_22 = arith.constant 0 : index
    %c0_23 = arith.constant 0 : index
    %22 = vector.load %arg8[%c0_21, %c0_22, %c0_23] : memref<4x8x1xf32, #tpu.memory_space<vmem>>, vector<4x8x1xf32>
    %c0_24 = arith.constant 0 : index
    %c0_25 = arith.constant 0 : index
    %c0_26 = arith.constant 0 : index
    %23 = vector.load %arg11[%c0_24, %c0_25, %c0_26] : memref<5x8x1xf32, #tpu.memory_space<vmem>>, vector<5x8x1xf32>
    %c0_27 = arith.constant 0 : index
    %c0_28 = arith.constant 0 : index
    %c0_29 = arith.constant 0 : index
    %24 = vector.load %arg12[%c0_27, %c0_28, %c0_29] : memref<5x8x1xf32, #tpu.memory_space<vmem>>, vector<5x8x1xf32>
    %c0_30 = arith.constant 0 : index
    %c0_31 = arith.constant 0 : index
    %c0_32 = arith.constant 0 : index
    %c0_33 = arith.constant 0 : index
    %25 = vector.load %arg6[%c0_30, %c0_31, %c0_32, %c0_33] : memref<4x3x8x1xf32, #tpu.memory_space<vmem>>, vector<4x3x8x1xf32>
    %c0_34 = arith.constant 0 : index
    %c0_35 = arith.constant 0 : index
    %c0_36 = arith.constant 0 : index
    %c0_37 = arith.constant 0 : index
    %26 = vector.load %arg9[%c0_34, %c0_35, %c0_36, %c0_37] : memref<4x3x8x1xf32, #tpu.memory_space<vmem>>, vector<4x3x8x1xf32>
    %c0_38 = arith.constant 0 : index
    %c0_39 = arith.constant 0 : index
    %c0_40 = arith.constant 0 : index
    %27 = vector.load %arg10[%c0_38, %c0_39, %c0_40] : memref<9x8x1xf32, #tpu.memory_space<vmem>>, vector<9x8x1xf32>
    %28 = vector.extract_strided_slice %19 {offsets = [0, 0, 0], sizes = [1, 8, 1], strides = [1, 1, 1]} : vector<6x8x1xf32> to vector<1x8x1xf32>
    %29 = vector.shape_cast %28 : vector<1x8x1xf32> to vector<8x1xf32>
    %30 = vector.broadcast %29 : vector<8x1xf32> to vector<8x256xf32>
    %31 = arith.mulf %18, %30 : vector<8x256xf32>
    %32 = vector.extract_strided_slice %20 {offsets = [0, 0, 0], sizes = [1, 8, 1], strides = [1, 1, 1]} : vector<6x8x1xf32> to vector<1x8x1xf32>
    %33 = vector.shape_cast %32 : vector<1x8x1xf32> to vector<8x1xf32>
    %34 = vector.broadcast %33 : vector<8x1xf32> to vector<8x256xf32>
    %35 = arith.addf %31, %34 : vector<8x256xf32>
    %cst_41 = arith.constant 0.000000e+00 : f32
    %36 = vector.broadcast %cst_41 : f32 to vector<8x256xf32>
    %37 = arith.cmpf ogt, %35, %36 : vector<8x256xf32>
    %cst_42 = arith.constant 1.000000e-01 : f32
    %38 = vector.broadcast %cst_42 : f32 to vector<8x256xf32>
    %39 = arith.mulf %38, %35 : vector<8x256xf32>
    %40 = arith.select %37, %35, %39 : vector<8x256xi1>, vector<8x256xf32>
    %41 = vector.extract_strided_slice %25 {offsets = [0, 1, 0, 0], sizes = [1, 1, 8, 1], strides = [1, 1, 1, 1]} : vector<4x3x8x1xf32> to vector<1x1x8x1xf32>
    %42 = vector.shape_cast %41 : vector<1x1x8x1xf32> to vector<8x1xf32>
    %43 = vector.broadcast %42 : vector<8x1xf32> to vector<8x256xf32>
    %44 = arith.mulf %43, %40 : vector<8x256xf32>
    %45 = vector.extract_strided_slice %25 {offsets = [0, 0, 0, 0], sizes = [1, 1, 8, 1], strides = [1, 1, 1, 1]} : vector<4x3x8x1xf32> to vector<1x1x8x1xf32>
    %46 = vector.shape_cast %45 : vector<1x1x8x1xf32> to vector<8x1xf32>
    %cst_43 = arith.constant 0.000000e+00 : f32
    %47 = vector.broadcast %cst_43 : f32 to vector<8x48xf32>
    %48 = vector.extract_strided_slice %40 {offsets = [0, 0], sizes = [8, 208], strides = [1, 1]} : vector<8x256xf32> to vector<8x208xf32>
    %49 = tpu.concatenate %47, %48 in 1 : vector<8x48xf32>, vector<8x208xf32> -> vector<8x256xf32>
    %50 = vector.broadcast %46 : vector<8x1xf32> to vector<8x256xf32>
    %51 = arith.mulf %50, %49 : vector<8x256xf32>
    %52 = arith.addf %44, %51 : vector<8x256xf32>
    %53 = vector.extract_strided_slice %25 {offsets = [0, 2, 0, 0], sizes = [1, 1, 8, 1], strides = [1, 1, 1, 1]} : vector<4x3x8x1xf32> to vector<1x1x8x1xf32>
    %54 = vector.shape_cast %53 : vector<1x1x8x1xf32> to vector<8x1xf32>
    %cst_44 = arith.constant 0.000000e+00 : f32
    %55 = vector.broadcast %cst_44 : f32 to vector<8x48xf32>
    %56 = vector.extract_strided_slice %40 {offsets = [0, 48], sizes = [8, 208], strides = [1, 1]} : vector<8x256xf32> to vector<8x208xf32>
    %57 = tpu.concatenate %56, %55 in 1 : vector<8x208xf32>, vector<8x48xf32> -> vector<8x256xf32>
    %58 = vector.broadcast %54 : vector<8x1xf32> to vector<8x256xf32>
    %59 = arith.mulf %58, %57 : vector<8x256xf32>
    %60 = arith.addf %52, %59 : vector<8x256xf32>
    %61 = vector.extract_strided_slice %21 {offsets = [0, 0, 0], sizes = [1, 8, 1], strides = [1, 1, 1]} : vector<4x8x1xf32> to vector<1x8x1xf32>
    %62 = vector.shape_cast %61 : vector<1x8x1xf32> to vector<8x1xf32>
    %63 = vector.broadcast %62 : vector<8x1xf32> to vector<8x256xf32>
    %64 = arith.mulf %60, %63 : vector<8x256xf32>
    %65 = vector.extract_strided_slice %22 {offsets = [0, 0, 0], sizes = [1, 8, 1], strides = [1, 1, 1]} : vector<4x8x1xf32> to vector<1x8x1xf32>
    %66 = vector.shape_cast %65 : vector<1x8x1xf32> to vector<8x1xf32>
    %67 = vector.broadcast %66 : vector<8x1xf32> to vector<8x256xf32>
    %68 = arith.addf %64, %67 : vector<8x256xf32>
    %cst_45 = arith.constant 0.000000e+00 : f32
    %69 = vector.broadcast %cst_45 : f32 to vector<8x256xf32>
    %70 = arith.cmpf ogt, %68, %69 : vector<8x256xf32>
    %cst_46 = arith.constant 1.000000e-01 : f32
    %71 = vector.broadcast %cst_46 : f32 to vector<8x256xf32>
    %72 = arith.mulf %71, %68 : vector<8x256xf32>
    %73 = arith.select %70, %68, %72 : vector<8x256xi1>, vector<8x256xf32>
    %74 = vector.extract_strided_slice %26 {offsets = [0, 1, 0, 0], sizes = [1, 1, 8, 1], strides = [1, 1, 1, 1]} : vector<4x3x8x1xf32> to vector<1x1x8x1xf32>
    %75 = vector.shape_cast %74 : vector<1x1x8x1xf32> to vector<8x1xf32>
    %76 = vector.broadcast %75 : vector<8x1xf32> to vector<8x256xf32>
    %77 = arith.mulf %76, %73 : vector<8x256xf32>
    %78 = vector.extract_strided_slice %26 {offsets = [0, 0, 0, 0], sizes = [1, 1, 8, 1], strides = [1, 1, 1, 1]} : vector<4x3x8x1xf32> to vector<1x1x8x1xf32>
    %79 = vector.shape_cast %78 : vector<1x1x8x1xf32> to vector<8x1xf32>
    %cst_47 = arith.constant 0.000000e+00 : f32
    %80 = vector.broadcast %cst_47 : f32 to vector<8x3xf32>
    %81 = vector.extract_strided_slice %73 {offsets = [0, 0], sizes = [8, 253], strides = [1, 1]} : vector<8x256xf32> to vector<8x253xf32>
    %82 = tpu.concatenate %80, %81 in 1 : vector<8x3xf32>, vector<8x253xf32> -> vector<8x256xf32>
    %83 = vector.extract_strided_slice %0 {offsets = [1, 0, 0], sizes = [1, 1, 256], strides = [1, 1, 1]} : vector<4x2x256xf32> to vector<1x1x256xf32>
    %84 = vector.shape_cast %83 : vector<1x1x256xf32> to vector<1x256xf32>
    %85 = vector.broadcast %84 : vector<1x256xf32> to vector<8x256xf32>
    %86 = arith.mulf %82, %85 : vector<8x256xf32>
    %87 = vector.broadcast %79 : vector<8x1xf32> to vector<8x256xf32>
    %88 = arith.mulf %87, %86 : vector<8x256xf32>
    %89 = arith.addf %77, %88 : vector<8x256xf32>
    %90 = vector.extract_strided_slice %26 {offsets = [0, 2, 0, 0], sizes = [1, 1, 8, 1], strides = [1, 1, 1, 1]} : vector<4x3x8x1xf32> to vector<1x1x8x1xf32>
    %91 = vector.shape_cast %90 : vector<1x1x8x1xf32> to vector<8x1xf32>
    %cst_48 = arith.constant 0.000000e+00 : f32
    %92 = vector.broadcast %cst_48 : f32 to vector<8x3xf32>
    %93 = vector.extract_strided_slice %73 {offsets = [0, 3], sizes = [8, 253], strides = [1, 1]} : vector<8x256xf32> to vector<8x253xf32>
    %94 = tpu.concatenate %93, %92 in 1 : vector<8x253xf32>, vector<8x3xf32> -> vector<8x256xf32>
    %95 = vector.extract_strided_slice %0 {offsets = [1, 1, 0], sizes = [1, 1, 256], strides = [1, 1, 1]} : vector<4x2x256xf32> to vector<1x1x256xf32>
    %96 = vector.shape_cast %95 : vector<1x1x256xf32> to vector<1x256xf32>
    %97 = vector.broadcast %96 : vector<1x256xf32> to vector<8x256xf32>
    %98 = arith.mulf %94, %97 : vector<8x256xf32>
    %99 = vector.broadcast %91 : vector<8x1xf32> to vector<8x256xf32>
    %100 = arith.mulf %99, %98 : vector<8x256xf32>
    %101 = arith.addf %89, %100 : vector<8x256xf32>
    %102 = vector.extract_strided_slice %23 {offsets = [0, 0, 0], sizes = [1, 8, 1], strides = [1, 1, 1]} : vector<5x8x1xf32> to vector<1x8x1xf32>
    %103 = vector.shape_cast %102 : vector<1x8x1xf32> to vector<8x1xf32>
    %104 = vector.broadcast %103 : vector<8x1xf32> to vector<8x256xf32>
    %105 = arith.mulf %101, %104 : vector<8x256xf32>
    %106 = vector.extract_strided_slice %24 {offsets = [0, 0, 0], sizes = [1, 8, 1], strides = [1, 1, 1]} : vector<5x8x1xf32> to vector<1x8x1xf32>
    %107 = vector.shape_cast %106 : vector<1x8x1xf32> to vector<8x1xf32>
    %108 = vector.broadcast %107 : vector<8x1xf32> to vector<8x256xf32>
    %109 = arith.addf %105, %108 : vector<8x256xf32>
    %cst_49 = arith.constant 0.000000e+00 : f32
    %110 = vector.broadcast %cst_49 : f32 to vector<8x256xf32>
    %111 = arith.cmpf ogt, %109, %110 : vector<8x256xf32>
    %cst_50 = arith.constant 1.000000e-01 : f32
    %112 = vector.broadcast %cst_50 : f32 to vector<8x256xf32>
    %113 = arith.mulf %112, %109 : vector<8x256xf32>
    %114 = arith.select %111, %109, %113 : vector<8x256xi1>, vector<8x256xf32>
    %115 = vector.extract_strided_slice %19 {offsets = [1, 0, 0], sizes = [1, 8, 1], strides = [1, 1, 1]} : vector<6x8x1xf32> to vector<1x8x1xf32>
    %116 = vector.shape_cast %115 : vector<1x8x1xf32> to vector<8x1xf32>
    %117 = vector.broadcast %116 : vector<8x1xf32> to vector<8x256xf32>
    %118 = arith.mulf %18, %117 : vector<8x256xf32>
    %119 = vector.extract_strided_slice %20 {offsets = [1, 0, 0], sizes = [1, 8, 1], strides = [1, 1, 1]} : vector<6x8x1xf32> to vector<1x8x1xf32>
    %120 = vector.shape_cast %119 : vector<1x8x1xf32> to vector<8x1xf32>
    %121 = vector.broadcast %120 : vector<8x1xf32> to vector<8x256xf32>
    %122 = arith.addf %118, %121 : vector<8x256xf32>
    %cst_51 = arith.constant 0.000000e+00 : f32
    %123 = vector.broadcast %cst_51 : f32 to vector<8x256xf32>
    %124 = arith.cmpf ogt, %122, %123 : vector<8x256xf32>
    %cst_52 = arith.constant 1.000000e-01 : f32
    %125 = vector.broadcast %cst_52 : f32 to vector<8x256xf32>
    %126 = arith.mulf %125, %122 : vector<8x256xf32>
    %127 = arith.select %124, %122, %126 : vector<8x256xi1>, vector<8x256xf32>
    %128 = vector.extract_strided_slice %25 {offsets = [1, 1, 0, 0], sizes = [1, 1, 8, 1], strides = [1, 1, 1, 1]} : vector<4x3x8x1xf32> to vector<1x1x8x1xf32>
    %129 = vector.shape_cast %128 : vector<1x1x8x1xf32> to vector<8x1xf32>
    %130 = vector.broadcast %129 : vector<8x1xf32> to vector<8x256xf32>
    %131 = arith.mulf %130, %127 : vector<8x256xf32>
    %132 = vector.extract_strided_slice %25 {offsets = [1, 0, 0, 0], sizes = [1, 1, 8, 1], strides = [1, 1, 1, 1]} : vector<4x3x8x1xf32> to vector<1x1x8x1xf32>
    %133 = vector.shape_cast %132 : vector<1x1x8x1xf32> to vector<8x1xf32>
    %cst_53 = arith.constant 0.000000e+00 : f32
    %134 = vector.broadcast %cst_53 : f32 to vector<8x96xf32>
    %135 = vector.extract_strided_slice %127 {offsets = [0, 0], sizes = [8, 160], strides = [1, 1]} : vector<8x256xf32> to vector<8x160xf32>
    %136 = tpu.concatenate %134, %135 in 1 : vector<8x96xf32>, vector<8x160xf32> -> vector<8x256xf32>
    %137 = vector.broadcast %133 : vector<8x1xf32> to vector<8x256xf32>
    %138 = arith.mulf %137, %136 : vector<8x256xf32>
    %139 = arith.addf %131, %138 : vector<8x256xf32>
    %140 = vector.extract_strided_slice %25 {offsets = [1, 2, 0, 0], sizes = [1, 1, 8, 1], strides = [1, 1, 1, 1]} : vector<4x3x8x1xf32> to vector<1x1x8x1xf32>
    %141 = vector.shape_cast %140 : vector<1x1x8x1xf32> to vector<8x1xf32>
    %cst_54 = arith.constant 0.000000e+00 : f32
    %142 = vector.broadcast %cst_54 : f32 to vector<8x96xf32>
    %143 = vector.extract_strided_slice %127 {offsets = [0, 96], sizes = [8, 160], strides = [1, 1]} : vector<8x256xf32> to vector<8x160xf32>
    %144 = tpu.concatenate %143, %142 in 1 : vector<8x160xf32>, vector<8x96xf32> -> vector<8x256xf32>
    %145 = vector.broadcast %141 : vector<8x1xf32> to vector<8x256xf32>
    %146 = arith.mulf %145, %144 : vector<8x256xf32>
    %147 = arith.addf %139, %146 : vector<8x256xf32>
    %148 = vector.extract_strided_slice %21 {offsets = [1, 0, 0], sizes = [1, 8, 1], strides = [1, 1, 1]} : vector<4x8x1xf32> to vector<1x8x1xf32>
    %149 = vector.shape_cast %148 : vector<1x8x1xf32> to vector<8x1xf32>
    %150 = vector.broadcast %149 : vector<8x1xf32> to vector<8x256xf32>
    %151 = arith.mulf %147, %150 : vector<8x256xf32>
    %152 = vector.extract_strided_slice %22 {offsets = [1, 0, 0], sizes = [1, 8, 1], strides = [1, 1, 1]} : vector<4x8x1xf32> to vector<1x8x1xf32>
    %153 = vector.shape_cast %152 : vector<1x8x1xf32> to vector<8x1xf32>
    %154 = vector.broadcast %153 : vector<8x1xf32> to vector<8x256xf32>
    %155 = arith.addf %151, %154 : vector<8x256xf32>
    %cst_55 = arith.constant 0.000000e+00 : f32
    %156 = vector.broadcast %cst_55 : f32 to vector<8x256xf32>
    %157 = arith.cmpf ogt, %155, %156 : vector<8x256xf32>
    %cst_56 = arith.constant 1.000000e-01 : f32
    %158 = vector.broadcast %cst_56 : f32 to vector<8x256xf32>
    %159 = arith.mulf %158, %155 : vector<8x256xf32>
    %160 = arith.select %157, %155, %159 : vector<8x256xi1>, vector<8x256xf32>
    %161 = vector.extract_strided_slice %26 {offsets = [1, 1, 0, 0], sizes = [1, 1, 8, 1], strides = [1, 1, 1, 1]} : vector<4x3x8x1xf32> to vector<1x1x8x1xf32>
    %162 = vector.shape_cast %161 : vector<1x1x8x1xf32> to vector<8x1xf32>
    %163 = vector.broadcast %162 : vector<8x1xf32> to vector<8x256xf32>
    %164 = arith.mulf %163, %160 : vector<8x256xf32>
    %165 = vector.extract_strided_slice %26 {offsets = [1, 0, 0, 0], sizes = [1, 1, 8, 1], strides = [1, 1, 1, 1]} : vector<4x3x8x1xf32> to vector<1x1x8x1xf32>
    %166 = vector.shape_cast %165 : vector<1x1x8x1xf32> to vector<8x1xf32>
    %cst_57 = arith.constant 0.000000e+00 : f32
    %167 = vector.broadcast %cst_57 : f32 to vector<8x6xf32>
    %168 = vector.extract_strided_slice %160 {offsets = [0, 0], sizes = [8, 250], strides = [1, 1]} : vector<8x256xf32> to vector<8x250xf32>
    %169 = tpu.concatenate %167, %168 in 1 : vector<8x6xf32>, vector<8x250xf32> -> vector<8x256xf32>
    %170 = vector.extract_strided_slice %0 {offsets = [2, 0, 0], sizes = [1, 1, 256], strides = [1, 1, 1]} : vector<4x2x256xf32> to vector<1x1x256xf32>
    %171 = vector.shape_cast %170 : vector<1x1x256xf32> to vector<1x256xf32>
    %172 = vector.broadcast %171 : vector<1x256xf32> to vector<8x256xf32>
    %173 = arith.mulf %169, %172 : vector<8x256xf32>
    %174 = vector.broadcast %166 : vector<8x1xf32> to vector<8x256xf32>
    %175 = arith.mulf %174, %173 : vector<8x256xf32>
    %176 = arith.addf %164, %175 : vector<8x256xf32>
    %177 = vector.extract_strided_slice %26 {offsets = [1, 2, 0, 0], sizes = [1, 1, 8, 1], strides = [1, 1, 1, 1]} : vector<4x3x8x1xf32> to vector<1x1x8x1xf32>
    %178 = vector.shape_cast %177 : vector<1x1x8x1xf32> to vector<8x1xf32>
    %cst_58 = arith.constant 0.000000e+00 : f32
    %179 = vector.broadcast %cst_58 : f32 to vector<8x6xf32>
    %180 = vector.extract_strided_slice %160 {offsets = [0, 6], sizes = [8, 250], strides = [1, 1]} : vector<8x256xf32> to vector<8x250xf32>
    %181 = tpu.concatenate %180, %179 in 1 : vector<8x250xf32>, vector<8x6xf32> -> vector<8x256xf32>
    %182 = vector.extract_strided_slice %0 {offsets = [2, 1, 0], sizes = [1, 1, 256], strides = [1, 1, 1]} : vector<4x2x256xf32> to vector<1x1x256xf32>
    %183 = vector.shape_cast %182 : vector<1x1x256xf32> to vector<1x256xf32>
    %184 = vector.broadcast %183 : vector<1x256xf32> to vector<8x256xf32>
    %185 = arith.mulf %181, %184 : vector<8x256xf32>
    %186 = vector.broadcast %178 : vector<8x1xf32> to vector<8x256xf32>
    %187 = arith.mulf %186, %185 : vector<8x256xf32>
    %188 = arith.addf %176, %187 : vector<8x256xf32>
    %189 = vector.extract_strided_slice %23 {offsets = [1, 0, 0], sizes = [1, 8, 1], strides = [1, 1, 1]} : vector<5x8x1xf32> to vector<1x8x1xf32>
    %190 = vector.shape_cast %189 : vector<1x8x1xf32> to vector<8x1xf32>
    %191 = vector.broadcast %190 : vector<8x1xf32> to vector<8x256xf32>
    %192 = arith.mulf %188, %191 : vector<8x256xf32>
    %193 = vector.extract_strided_slice %24 {offsets = [1, 0, 0], sizes = [1, 8, 1], strides = [1, 1, 1]} : vector<5x8x1xf32> to vector<1x8x1xf32>
    %194 = vector.shape_cast %193 : vector<1x8x1xf32> to vector<8x1xf32>
    %195 = vector.broadcast %194 : vector<8x1xf32> to vector<8x256xf32>
    %196 = arith.addf %192, %195 : vector<8x256xf32>
    %cst_59 = arith.constant 0.000000e+00 : f32
    %197 = vector.broadcast %cst_59 : f32 to vector<8x256xf32>
    %198 = arith.cmpf ogt, %196, %197 : vector<8x256xf32>
    %cst_60 = arith.constant 1.000000e-01 : f32
    %199 = vector.broadcast %cst_60 : f32 to vector<8x256xf32>
    %200 = arith.mulf %199, %196 : vector<8x256xf32>
    %201 = arith.select %198, %196, %200 : vector<8x256xi1>, vector<8x256xf32>
    %202 = vector.extract_strided_slice %19 {offsets = [2, 0, 0], sizes = [1, 8, 1], strides = [1, 1, 1]} : vector<6x8x1xf32> to vector<1x8x1xf32>
    %203 = vector.shape_cast %202 : vector<1x8x1xf32> to vector<8x1xf32>
    %204 = vector.broadcast %203 : vector<8x1xf32> to vector<8x256xf32>
    %205 = arith.mulf %18, %204 : vector<8x256xf32>
    %206 = vector.extract_strided_slice %20 {offsets = [2, 0, 0], sizes = [1, 8, 1], strides = [1, 1, 1]} : vector<6x8x1xf32> to vector<1x8x1xf32>
    %207 = vector.shape_cast %206 : vector<1x8x1xf32> to vector<8x1xf32>
    %208 = vector.broadcast %207 : vector<8x1xf32> to vector<8x256xf32>
    %209 = arith.addf %205, %208 : vector<8x256xf32>
    %cst_61 = arith.constant 0.000000e+00 : f32
    %210 = vector.broadcast %cst_61 : f32 to vector<8x256xf32>
    %211 = arith.cmpf ogt, %209, %210 : vector<8x256xf32>
    %cst_62 = arith.constant 1.000000e-01 : f32
    %212 = vector.broadcast %cst_62 : f32 to vector<8x256xf32>
    %213 = arith.mulf %212, %209 : vector<8x256xf32>
    %214 = arith.select %211, %209, %213 : vector<8x256xi1>, vector<8x256xf32>
    %215 = vector.extract_strided_slice %25 {offsets = [2, 1, 0, 0], sizes = [1, 1, 8, 1], strides = [1, 1, 1, 1]} : vector<4x3x8x1xf32> to vector<1x1x8x1xf32>
    %216 = vector.shape_cast %215 : vector<1x1x8x1xf32> to vector<8x1xf32>
    %217 = vector.broadcast %216 : vector<8x1xf32> to vector<8x256xf32>
    %218 = arith.mulf %217, %214 : vector<8x256xf32>
    %219 = vector.extract_strided_slice %25 {offsets = [2, 0, 0, 0], sizes = [1, 1, 8, 1], strides = [1, 1, 1, 1]} : vector<4x3x8x1xf32> to vector<1x1x8x1xf32>
    %220 = vector.shape_cast %219 : vector<1x1x8x1xf32> to vector<8x1xf32>
    %cst_63 = arith.constant 0.000000e+00 : f32
    %221 = vector.broadcast %cst_63 : f32 to vector<8x192xf32>
    %222 = vector.extract_strided_slice %214 {offsets = [0, 0], sizes = [8, 64], strides = [1, 1]} : vector<8x256xf32> to vector<8x64xf32>
    %223 = tpu.concatenate %221, %222 in 1 : vector<8x192xf32>, vector<8x64xf32> -> vector<8x256xf32>
    %224 = vector.broadcast %220 : vector<8x1xf32> to vector<8x256xf32>
    %225 = arith.mulf %224, %223 : vector<8x256xf32>
    %226 = arith.addf %218, %225 : vector<8x256xf32>
    %227 = vector.extract_strided_slice %25 {offsets = [2, 2, 0, 0], sizes = [1, 1, 8, 1], strides = [1, 1, 1, 1]} : vector<4x3x8x1xf32> to vector<1x1x8x1xf32>
    %228 = vector.shape_cast %227 : vector<1x1x8x1xf32> to vector<8x1xf32>
    %cst_64 = arith.constant 0.000000e+00 : f32
    %229 = vector.broadcast %cst_64 : f32 to vector<8x192xf32>
    %230 = vector.extract_strided_slice %214 {offsets = [0, 192], sizes = [8, 64], strides = [1, 1]} : vector<8x256xf32> to vector<8x64xf32>
    %231 = tpu.concatenate %230, %229 in 1 : vector<8x64xf32>, vector<8x192xf32> -> vector<8x256xf32>
    %232 = vector.broadcast %228 : vector<8x1xf32> to vector<8x256xf32>
    %233 = arith.mulf %232, %231 : vector<8x256xf32>
    %234 = arith.addf %226, %233 : vector<8x256xf32>
    %235 = vector.extract_strided_slice %21 {offsets = [2, 0, 0], sizes = [1, 8, 1], strides = [1, 1, 1]} : vector<4x8x1xf32> to vector<1x8x1xf32>
    %236 = vector.shape_cast %235 : vector<1x8x1xf32> to vector<8x1xf32>
    %237 = vector.broadcast %236 : vector<8x1xf32> to vector<8x256xf32>
    %238 = arith.mulf %234, %237 : vector<8x256xf32>
    %239 = vector.extract_strided_slice %22 {offsets = [2, 0, 0], sizes = [1, 8, 1], strides = [1, 1, 1]} : vector<4x8x1xf32> to vector<1x8x1xf32>
    %240 = vector.shape_cast %239 : vector<1x8x1xf32> to vector<8x1xf32>
    %241 = vector.broadcast %240 : vector<8x1xf32> to vector<8x256xf32>
    %242 = arith.addf %238, %241 : vector<8x256xf32>
    %cst_65 = arith.constant 0.000000e+00 : f32
    %243 = vector.broadcast %cst_65 : f32 to vector<8x256xf32>
    %244 = arith.cmpf ogt, %242, %243 : vector<8x256xf32>
    %cst_66 = arith.constant 1.000000e-01 : f32
    %245 = vector.broadcast %cst_66 : f32 to vector<8x256xf32>
    %246 = arith.mulf %245, %242 : vector<8x256xf32>
    %247 = arith.select %244, %242, %246 : vector<8x256xi1>, vector<8x256xf32>
    %248 = vector.extract_strided_slice %26 {offsets = [2, 1, 0, 0], sizes = [1, 1, 8, 1], strides = [1, 1, 1, 1]} : vector<4x3x8x1xf32> to vector<1x1x8x1xf32>
    %249 = vector.shape_cast %248 : vector<1x1x8x1xf32> to vector<8x1xf32>
    %250 = vector.broadcast %249 : vector<8x1xf32> to vector<8x256xf32>
    %251 = arith.mulf %250, %247 : vector<8x256xf32>
    %252 = vector.extract_strided_slice %26 {offsets = [2, 0, 0, 0], sizes = [1, 1, 8, 1], strides = [1, 1, 1, 1]} : vector<4x3x8x1xf32> to vector<1x1x8x1xf32>
    %253 = vector.shape_cast %252 : vector<1x1x8x1xf32> to vector<8x1xf32>
    %cst_67 = arith.constant 0.000000e+00 : f32
    %254 = vector.broadcast %cst_67 : f32 to vector<8x12xf32>
    %255 = vector.extract_strided_slice %247 {offsets = [0, 0], sizes = [8, 244], strides = [1, 1]} : vector<8x256xf32> to vector<8x244xf32>
    %256 = tpu.concatenate %254, %255 in 1 : vector<8x12xf32>, vector<8x244xf32> -> vector<8x256xf32>
    %257 = vector.extract_strided_slice %0 {offsets = [3, 0, 0], sizes = [1, 1, 256], strides = [1, 1, 1]} : vector<4x2x256xf32> to vector<1x1x256xf32>
    %258 = vector.shape_cast %257 : vector<1x1x256xf32> to vector<1x256xf32>
    %259 = vector.broadcast %258 : vector<1x256xf32> to vector<8x256xf32>
    %260 = arith.mulf %256, %259 : vector<8x256xf32>
    %261 = vector.broadcast %253 : vector<8x1xf32> to vector<8x256xf32>
    %262 = arith.mulf %261, %260 : vector<8x256xf32>
    %263 = arith.addf %251, %262 : vector<8x256xf32>
    %264 = vector.extract_strided_slice %26 {offsets = [2, 2, 0, 0], sizes = [1, 1, 8, 1], strides = [1, 1, 1, 1]} : vector<4x3x8x1xf32> to vector<1x1x8x1xf32>
    %265 = vector.shape_cast %264 : vector<1x1x8x1xf32> to vector<8x1xf32>
    %cst_68 = arith.constant 0.000000e+00 : f32
    %266 = vector.broadcast %cst_68 : f32 to vector<8x12xf32>
    %267 = vector.extract_strided_slice %247 {offsets = [0, 12], sizes = [8, 244], strides = [1, 1]} : vector<8x256xf32> to vector<8x244xf32>
    %268 = tpu.concatenate %267, %266 in 1 : vector<8x244xf32>, vector<8x12xf32> -> vector<8x256xf32>
    %269 = vector.extract_strided_slice %0 {offsets = [3, 1, 0], sizes = [1, 1, 256], strides = [1, 1, 1]} : vector<4x2x256xf32> to vector<1x1x256xf32>
    %270 = vector.shape_cast %269 : vector<1x1x256xf32> to vector<1x256xf32>
    %271 = vector.broadcast %270 : vector<1x256xf32> to vector<8x256xf32>
    %272 = arith.mulf %268, %271 : vector<8x256xf32>
    %273 = vector.broadcast %265 : vector<8x1xf32> to vector<8x256xf32>
    %274 = arith.mulf %273, %272 : vector<8x256xf32>
    %275 = arith.addf %263, %274 : vector<8x256xf32>
    %276 = vector.extract_strided_slice %23 {offsets = [2, 0, 0], sizes = [1, 8, 1], strides = [1, 1, 1]} : vector<5x8x1xf32> to vector<1x8x1xf32>
    %277 = vector.shape_cast %276 : vector<1x8x1xf32> to vector<8x1xf32>
    %278 = vector.broadcast %277 : vector<8x1xf32> to vector<8x256xf32>
    %279 = arith.mulf %275, %278 : vector<8x256xf32>
    %280 = vector.extract_strided_slice %24 {offsets = [2, 0, 0], sizes = [1, 8, 1], strides = [1, 1, 1]} : vector<5x8x1xf32> to vector<1x8x1xf32>
    %281 = vector.shape_cast %280 : vector<1x8x1xf32> to vector<8x1xf32>
    %282 = vector.broadcast %281 : vector<8x1xf32> to vector<8x256xf32>
    %283 = arith.addf %279, %282 : vector<8x256xf32>
    %cst_69 = arith.constant 0.000000e+00 : f32
    %284 = vector.broadcast %cst_69 : f32 to vector<8x256xf32>
    %285 = arith.cmpf ogt, %283, %284 : vector<8x256xf32>
    %cst_70 = arith.constant 1.000000e-01 : f32
    %286 = vector.broadcast %cst_70 : f32 to vector<8x256xf32>
    %287 = arith.mulf %286, %283 : vector<8x256xf32>
    %288 = arith.select %285, %283, %287 : vector<8x256xi1>, vector<8x256xf32>
    %289 = vector.extract_strided_slice %19 {offsets = [3, 0, 0], sizes = [1, 8, 1], strides = [1, 1, 1]} : vector<6x8x1xf32> to vector<1x8x1xf32>
    %290 = vector.shape_cast %289 : vector<1x8x1xf32> to vector<8x1xf32>
    %291 = vector.broadcast %290 : vector<8x1xf32> to vector<8x256xf32>
    %292 = arith.mulf %18, %291 : vector<8x256xf32>
    %293 = vector.extract_strided_slice %20 {offsets = [3, 0, 0], sizes = [1, 8, 1], strides = [1, 1, 1]} : vector<6x8x1xf32> to vector<1x8x1xf32>
    %294 = vector.shape_cast %293 : vector<1x8x1xf32> to vector<8x1xf32>
    %295 = vector.broadcast %294 : vector<8x1xf32> to vector<8x256xf32>
    %296 = arith.addf %292, %295 : vector<8x256xf32>
    %cst_71 = arith.constant 0.000000e+00 : f32
    %297 = vector.broadcast %cst_71 : f32 to vector<8x256xf32>
    %298 = arith.cmpf ogt, %296, %297 : vector<8x256xf32>
    %cst_72 = arith.constant 1.000000e-01 : f32
    %299 = vector.broadcast %cst_72 : f32 to vector<8x256xf32>
    %300 = arith.mulf %299, %296 : vector<8x256xf32>
    %301 = arith.select %298, %296, %300 : vector<8x256xi1>, vector<8x256xf32>
    %302 = vector.extract_strided_slice %25 {offsets = [3, 1, 0, 0], sizes = [1, 1, 8, 1], strides = [1, 1, 1, 1]} : vector<4x3x8x1xf32> to vector<1x1x8x1xf32>
    %303 = vector.shape_cast %302 : vector<1x1x8x1xf32> to vector<8x1xf32>
    %304 = vector.broadcast %303 : vector<8x1xf32> to vector<8x256xf32>
    %305 = arith.mulf %304, %301 : vector<8x256xf32>
    %306 = vector.extract_strided_slice %21 {offsets = [3, 0, 0], sizes = [1, 8, 1], strides = [1, 1, 1]} : vector<4x8x1xf32> to vector<1x8x1xf32>
    %307 = vector.shape_cast %306 : vector<1x8x1xf32> to vector<8x1xf32>
    %308 = vector.broadcast %307 : vector<8x1xf32> to vector<8x256xf32>
    %309 = arith.mulf %305, %308 : vector<8x256xf32>
    %310 = vector.extract_strided_slice %22 {offsets = [3, 0, 0], sizes = [1, 8, 1], strides = [1, 1, 1]} : vector<4x8x1xf32> to vector<1x8x1xf32>
    %311 = vector.shape_cast %310 : vector<1x8x1xf32> to vector<8x1xf32>
    %312 = vector.broadcast %311 : vector<8x1xf32> to vector<8x256xf32>
    %313 = arith.addf %309, %312 : vector<8x256xf32>
    %cst_73 = arith.constant 0.000000e+00 : f32
    %314 = vector.broadcast %cst_73 : f32 to vector<8x256xf32>
    %315 = arith.cmpf ogt, %313, %314 : vector<8x256xf32>
    %cst_74 = arith.constant 1.000000e-01 : f32
    %316 = vector.broadcast %cst_74 : f32 to vector<8x256xf32>
    %317 = arith.mulf %316, %313 : vector<8x256xf32>
    %318 = arith.select %315, %313, %317 : vector<8x256xi1>, vector<8x256xf32>
    %319 = vector.extract_strided_slice %26 {offsets = [3, 1, 0, 0], sizes = [1, 1, 8, 1], strides = [1, 1, 1, 1]} : vector<4x3x8x1xf32> to vector<1x1x8x1xf32>
    %320 = vector.shape_cast %319 : vector<1x1x8x1xf32> to vector<8x1xf32>
    %321 = vector.broadcast %320 : vector<8x1xf32> to vector<8x256xf32>
    %322 = arith.mulf %321, %318 : vector<8x256xf32>
    %323 = vector.extract_strided_slice %23 {offsets = [3, 0, 0], sizes = [1, 8, 1], strides = [1, 1, 1]} : vector<5x8x1xf32> to vector<1x8x1xf32>
    %324 = vector.shape_cast %323 : vector<1x8x1xf32> to vector<8x1xf32>
    %325 = vector.broadcast %324 : vector<8x1xf32> to vector<8x256xf32>
    %326 = arith.mulf %322, %325 : vector<8x256xf32>
    %327 = vector.extract_strided_slice %24 {offsets = [3, 0, 0], sizes = [1, 8, 1], strides = [1, 1, 1]} : vector<5x8x1xf32> to vector<1x8x1xf32>
    %328 = vector.shape_cast %327 : vector<1x8x1xf32> to vector<8x1xf32>
    %329 = vector.broadcast %328 : vector<8x1xf32> to vector<8x256xf32>
    %330 = arith.addf %326, %329 : vector<8x256xf32>
    %cst_75 = arith.constant 0.000000e+00 : f32
    %331 = vector.broadcast %cst_75 : f32 to vector<8x256xf32>
    %332 = arith.cmpf ogt, %330, %331 : vector<8x256xf32>
    %cst_76 = arith.constant 1.000000e-01 : f32
    %333 = vector.broadcast %cst_76 : f32 to vector<8x256xf32>
    %334 = arith.mulf %333, %330 : vector<8x256xf32>
    %335 = arith.select %332, %330, %334 : vector<8x256xi1>, vector<8x256xf32>
    %336 = vector.extract_strided_slice %19 {offsets = [4, 0, 0], sizes = [1, 8, 1], strides = [1, 1, 1]} : vector<6x8x1xf32> to vector<1x8x1xf32>
    %337 = vector.shape_cast %336 : vector<1x8x1xf32> to vector<8x1xf32>
    %338 = vector.broadcast %337 : vector<8x1xf32> to vector<8x256xf32>
    %339 = arith.mulf %18, %338 : vector<8x256xf32>
    %340 = vector.extract_strided_slice %20 {offsets = [4, 0, 0], sizes = [1, 8, 1], strides = [1, 1, 1]} : vector<6x8x1xf32> to vector<1x8x1xf32>
    %341 = vector.shape_cast %340 : vector<1x8x1xf32> to vector<8x1xf32>
    %342 = vector.broadcast %341 : vector<8x1xf32> to vector<8x256xf32>
    %343 = arith.addf %339, %342 : vector<8x256xf32>
    %cst_77 = arith.constant 0.000000e+00 : f32
    %344 = vector.broadcast %cst_77 : f32 to vector<8x256xf32>
    %345 = arith.cmpf ogt, %343, %344 : vector<8x256xf32>
    %cst_78 = arith.constant 1.000000e-01 : f32
    %346 = vector.broadcast %cst_78 : f32 to vector<8x256xf32>
    %347 = arith.mulf %346, %343 : vector<8x256xf32>
    %348 = arith.select %345, %343, %347 : vector<8x256xi1>, vector<8x256xf32>
    %cst_79 = arith.constant 0.000000e+00 : f32
    %349 = vector.broadcast %cst_79 : f32 to vector<8x17xf32>
    %350 = vector.extract_strided_slice %348 {offsets = [0, 0], sizes = [8, 239], strides = [1, 1]} : vector<8x256xf32> to vector<8x239xf32>
    %351 = tpu.concatenate %349, %350 in 1 : vector<8x17xf32>, vector<8x239xf32> -> vector<8x256xf32>
    %352 = vector.extract_strided_slice %0 {offsets = [0, 0, 0], sizes = [1, 1, 256], strides = [1, 1, 1]} : vector<4x2x256xf32> to vector<1x1x256xf32>
    %353 = vector.shape_cast %352 : vector<1x1x256xf32> to vector<1x256xf32>
    %354 = vector.broadcast %353 : vector<1x256xf32> to vector<8x256xf32>
    %355 = arith.mulf %351, %354 : vector<8x256xf32>
    %356 = vector.extract_strided_slice %27 {offsets = [0, 0, 0], sizes = [1, 8, 1], strides = [1, 1, 1]} : vector<9x8x1xf32> to vector<1x8x1xf32>
    %357 = vector.shape_cast %356 : vector<1x8x1xf32> to vector<8x1xf32>
    %358 = vector.broadcast %357 : vector<8x1xf32> to vector<8x256xf32>
    %359 = arith.mulf %358, %355 : vector<8x256xf32>
    %cst_80 = arith.constant 0.000000e+00 : f32
    %360 = vector.broadcast %cst_80 : f32 to vector<8x16xf32>
    %361 = vector.extract_strided_slice %348 {offsets = [0, 0], sizes = [8, 240], strides = [1, 1]} : vector<8x256xf32> to vector<8x240xf32>
    %362 = tpu.concatenate %360, %361 in 1 : vector<8x16xf32>, vector<8x240xf32> -> vector<8x256xf32>
    %363 = vector.extract_strided_slice %27 {offsets = [1, 0, 0], sizes = [1, 8, 1], strides = [1, 1, 1]} : vector<9x8x1xf32> to vector<1x8x1xf32>
    %364 = vector.shape_cast %363 : vector<1x8x1xf32> to vector<8x1xf32>
    %365 = vector.broadcast %364 : vector<8x1xf32> to vector<8x256xf32>
    %366 = arith.mulf %365, %362 : vector<8x256xf32>
    %cst_81 = arith.constant 0.000000e+00 : f32
    %367 = vector.broadcast %cst_81 : f32 to vector<8x15xf32>
    %368 = vector.extract_strided_slice %348 {offsets = [0, 0], sizes = [8, 241], strides = [1, 1]} : vector<8x256xf32> to vector<8x241xf32>
    %369 = tpu.concatenate %367, %368 in 1 : vector<8x15xf32>, vector<8x241xf32> -> vector<8x256xf32>
    %370 = vector.extract_strided_slice %0 {offsets = [0, 1, 0], sizes = [1, 1, 256], strides = [1, 1, 1]} : vector<4x2x256xf32> to vector<1x1x256xf32>
    %371 = vector.shape_cast %370 : vector<1x1x256xf32> to vector<1x256xf32>
    %372 = vector.broadcast %371 : vector<1x256xf32> to vector<8x256xf32>
    %373 = arith.mulf %369, %372 : vector<8x256xf32>
    %374 = vector.extract_strided_slice %27 {offsets = [2, 0, 0], sizes = [1, 8, 1], strides = [1, 1, 1]} : vector<9x8x1xf32> to vector<1x8x1xf32>
    %375 = vector.shape_cast %374 : vector<1x8x1xf32> to vector<8x1xf32>
    %376 = vector.broadcast %375 : vector<8x1xf32> to vector<8x256xf32>
    %377 = arith.mulf %376, %373 : vector<8x256xf32>
    %cst_82 = arith.constant 0.000000e+00 : f32
    %378 = vector.broadcast %cst_82 : f32 to vector<8x1xf32>
    %379 = vector.extract_strided_slice %348 {offsets = [0, 0], sizes = [8, 255], strides = [1, 1]} : vector<8x256xf32> to vector<8x255xf32>
    %380 = tpu.concatenate %378, %379 in 1 : vector<8x1xf32>, vector<8x255xf32> -> vector<8x256xf32>
    %381 = vector.extract_strided_slice %0 {offsets = [0, 0, 0], sizes = [1, 1, 256], strides = [1, 1, 1]} : vector<4x2x256xf32> to vector<1x1x256xf32>
    %382 = vector.shape_cast %381 : vector<1x1x256xf32> to vector<1x256xf32>
    %383 = vector.broadcast %382 : vector<1x256xf32> to vector<8x256xf32>
    %384 = arith.mulf %380, %383 : vector<8x256xf32>
    %385 = vector.extract_strided_slice %27 {offsets = [3, 0, 0], sizes = [1, 8, 1], strides = [1, 1, 1]} : vector<9x8x1xf32> to vector<1x8x1xf32>
    %386 = vector.shape_cast %385 : vector<1x8x1xf32> to vector<8x1xf32>
    %387 = vector.broadcast %386 : vector<8x1xf32> to vector<8x256xf32>
    %388 = arith.mulf %387, %384 : vector<8x256xf32>
    %389 = vector.extract_strided_slice %27 {offsets = [4, 0, 0], sizes = [1, 8, 1], strides = [1, 1, 1]} : vector<9x8x1xf32> to vector<1x8x1xf32>
    %390 = vector.shape_cast %389 : vector<1x8x1xf32> to vector<8x1xf32>
    %391 = vector.broadcast %390 : vector<8x1xf32> to vector<8x256xf32>
    %392 = arith.mulf %391, %348 : vector<8x256xf32>
    %cst_83 = arith.constant 0.000000e+00 : f32
    %393 = vector.broadcast %cst_83 : f32 to vector<8x1xf32>
    %394 = vector.extract_strided_slice %348 {offsets = [0, 1], sizes = [8, 255], strides = [1, 1]} : vector<8x256xf32> to vector<8x255xf32>
    %395 = tpu.concatenate %394, %393 in 1 : vector<8x255xf32>, vector<8x1xf32> -> vector<8x256xf32>
    %396 = vector.extract_strided_slice %0 {offsets = [0, 1, 0], sizes = [1, 1, 256], strides = [1, 1, 1]} : vector<4x2x256xf32> to vector<1x1x256xf32>
    %397 = vector.shape_cast %396 : vector<1x1x256xf32> to vector<1x256xf32>
    %398 = vector.broadcast %397 : vector<1x256xf32> to vector<8x256xf32>
    %399 = arith.mulf %395, %398 : vector<8x256xf32>
    %400 = vector.extract_strided_slice %27 {offsets = [5, 0, 0], sizes = [1, 8, 1], strides = [1, 1, 1]} : vector<9x8x1xf32> to vector<1x8x1xf32>
    %401 = vector.shape_cast %400 : vector<1x8x1xf32> to vector<8x1xf32>
    %402 = vector.broadcast %401 : vector<8x1xf32> to vector<8x256xf32>
    %403 = arith.mulf %402, %399 : vector<8x256xf32>
    %cst_84 = arith.constant 0.000000e+00 : f32
    %404 = vector.broadcast %cst_84 : f32 to vector<8x15xf32>
    %405 = vector.extract_strided_slice %348 {offsets = [0, 15], sizes = [8, 241], strides = [1, 1]} : vector<8x256xf32> to vector<8x241xf32>
    %406 = tpu.concatenate %405, %404 in 1 : vector<8x241xf32>, vector<8x15xf32> -> vector<8x256xf32>
    %407 = vector.extract_strided_slice %0 {offsets = [0, 0, 0], sizes = [1, 1, 256], strides = [1, 1, 1]} : vector<4x2x256xf32> to vector<1x1x256xf32>
    %408 = vector.shape_cast %407 : vector<1x1x256xf32> to vector<1x256xf32>
    %409 = vector.broadcast %408 : vector<1x256xf32> to vector<8x256xf32>
    %410 = arith.mulf %406, %409 : vector<8x256xf32>
    %411 = vector.extract_strided_slice %27 {offsets = [6, 0, 0], sizes = [1, 8, 1], strides = [1, 1, 1]} : vector<9x8x1xf32> to vector<1x8x1xf32>
    %412 = vector.shape_cast %411 : vector<1x8x1xf32> to vector<8x1xf32>
    %413 = vector.broadcast %412 : vector<8x1xf32> to vector<8x256xf32>
    %414 = arith.mulf %413, %410 : vector<8x256xf32>
    %cst_85 = arith.constant 0.000000e+00 : f32
    %415 = vector.broadcast %cst_85 : f32 to vector<8x16xf32>
    %416 = vector.extract_strided_slice %348 {offsets = [0, 16], sizes = [8, 240], strides = [1, 1]} : vector<8x256xf32> to vector<8x240xf32>
    %417 = tpu.concatenate %416, %415 in 1 : vector<8x240xf32>, vector<8x16xf32> -> vector<8x256xf32>
    %418 = vector.extract_strided_slice %27 {offsets = [7, 0, 0], sizes = [1, 8, 1], strides = [1, 1, 1]} : vector<9x8x1xf32> to vector<1x8x1xf32>
    %419 = vector.shape_cast %418 : vector<1x8x1xf32> to vector<8x1xf32>
    %420 = vector.broadcast %419 : vector<8x1xf32> to vector<8x256xf32>
    %421 = arith.mulf %420, %417 : vector<8x256xf32>
    %cst_86 = arith.constant 0.000000e+00 : f32
    %422 = vector.broadcast %cst_86 : f32 to vector<8x17xf32>
    %423 = vector.extract_strided_slice %348 {offsets = [0, 17], sizes = [8, 239], strides = [1, 1]} : vector<8x256xf32> to vector<8x239xf32>
    %424 = tpu.concatenate %423, %422 in 1 : vector<8x239xf32>, vector<8x17xf32> -> vector<8x256xf32>
    %425 = vector.extract_strided_slice %0 {offsets = [0, 1, 0], sizes = [1, 1, 256], strides = [1, 1, 1]} : vector<4x2x256xf32> to vector<1x1x256xf32>
    %426 = vector.shape_cast %425 : vector<1x1x256xf32> to vector<1x256xf32>
    %427 = vector.broadcast %426 : vector<1x256xf32> to vector<8x256xf32>
    %428 = arith.mulf %424, %427 : vector<8x256xf32>
    %429 = vector.extract_strided_slice %27 {offsets = [8, 0, 0], sizes = [1, 8, 1], strides = [1, 1, 1]} : vector<9x8x1xf32> to vector<1x8x1xf32>
    %430 = vector.shape_cast %429 : vector<1x8x1xf32> to vector<8x1xf32>
    %431 = vector.broadcast %430 : vector<8x1xf32> to vector<8x256xf32>
    %432 = arith.mulf %431, %428 : vector<8x256xf32>
    %433 = arith.addf %359, %366 : vector<8x256xf32>
    %434 = arith.addf %433, %377 : vector<8x256xf32>
    %435 = arith.addf %434, %388 : vector<8x256xf32>
    %436 = arith.addf %435, %392 : vector<8x256xf32>
    %437 = arith.addf %436, %403 : vector<8x256xf32>
    %438 = arith.addf %437, %414 : vector<8x256xf32>
    %439 = arith.addf %438, %421 : vector<8x256xf32>
    %440 = arith.addf %439, %432 : vector<8x256xf32>
    %441 = vector.extract_strided_slice %23 {offsets = [4, 0, 0], sizes = [1, 8, 1], strides = [1, 1, 1]} : vector<5x8x1xf32> to vector<1x8x1xf32>
    %442 = vector.shape_cast %441 : vector<1x8x1xf32> to vector<8x1xf32>
    %443 = vector.broadcast %442 : vector<8x1xf32> to vector<8x256xf32>
    %444 = arith.mulf %440, %443 : vector<8x256xf32>
    %445 = vector.extract_strided_slice %24 {offsets = [4, 0, 0], sizes = [1, 8, 1], strides = [1, 1, 1]} : vector<5x8x1xf32> to vector<1x8x1xf32>
    %446 = vector.shape_cast %445 : vector<1x8x1xf32> to vector<8x1xf32>
    %447 = vector.broadcast %446 : vector<8x1xf32> to vector<8x256xf32>
    %448 = arith.addf %444, %447 : vector<8x256xf32>
    %cst_87 = arith.constant 0.000000e+00 : f32
    %449 = vector.broadcast %cst_87 : f32 to vector<8x256xf32>
    %450 = arith.cmpf ogt, %448, %449 : vector<8x256xf32>
    %cst_88 = arith.constant 1.000000e-01 : f32
    %451 = vector.broadcast %cst_88 : f32 to vector<8x256xf32>
    %452 = arith.mulf %451, %448 : vector<8x256xf32>
    %453 = arith.select %450, %448, %452 : vector<8x256xi1>, vector<8x256xf32>
    %454 = vector.extract_strided_slice %19 {offsets = [5, 0, 0], sizes = [1, 8, 1], strides = [1, 1, 1]} : vector<6x8x1xf32> to vector<1x8x1xf32>
    %455 = vector.shape_cast %454 : vector<1x8x1xf32> to vector<8x1xf32>
    %456 = vector.broadcast %455 : vector<8x1xf32> to vector<8x256xf32>
    %457 = arith.mulf %18, %456 : vector<8x256xf32>
    %458 = vector.extract_strided_slice %20 {offsets = [5, 0, 0], sizes = [1, 8, 1], strides = [1, 1, 1]} : vector<6x8x1xf32> to vector<1x8x1xf32>
    %459 = vector.shape_cast %458 : vector<1x8x1xf32> to vector<8x1xf32>
    %460 = vector.broadcast %459 : vector<8x1xf32> to vector<8x256xf32>
    %461 = arith.addf %457, %460 : vector<8x256xf32>
    %cst_89 = arith.constant 0.000000e+00 : f32
    %462 = vector.broadcast %cst_89 : f32 to vector<8x256xf32>
    %463 = arith.cmpf ogt, %461, %462 : vector<8x256xf32>
    %cst_90 = arith.constant 1.000000e-01 : f32
    %464 = vector.broadcast %cst_90 : f32 to vector<8x256xf32>
    %465 = arith.mulf %464, %461 : vector<8x256xf32>
    %466 = arith.select %463, %461, %465 : vector<8x256xi1>, vector<8x256xf32>
    %cst_91 = arith.constant dense<0.000000e+00> : vector<8xf32>
    %467 = vector.multi_reduction <add>, %466, %cst_91 [1] : vector<8x256xf32> to vector<8xf32>
    %468 = vector.shape_cast %467 : vector<8xf32> to vector<8x1xf32>
    %cst_92 = arith.constant 3.906250e-03 : f32
    %469 = vector.broadcast %cst_92 : f32 to vector<8x1xf32>
    %470 = arith.mulf %468, %469 : vector<8x1xf32>
    %471 = vector.shape_cast %470 : vector<8x1xf32> to vector<8x1xf32>
    %472 = vector.broadcast %471 : vector<8x1xf32> to vector<8x256xf32>
    %473 = tpu.concatenate %114, %201, %288, %335, %453, %472 in 0 : vector<8x256xf32>, vector<8x256xf32>, vector<8x256xf32>, vector<8x256xf32>, vector<8x256xf32>, vector<8x256xf32> -> vector<48x256xf32>
    %c0_93 = arith.constant 0 : index
    %c0_94 = arith.constant 0 : index
    %474 = vector.load %arg13[%c0_93, %c0_94] : memref<128x48xf32, #tpu.memory_space<vmem>>, vector<128x48xf32>
    %cst_95 = arith.constant dense<0.000000e+00> : vector<128x256xf32>
    %475 = tpu.matmul %474, %473, %cst_95 {dimension_numbers = #tpu.dot_dimension_numbers<[1], [0], [0], [1], [0, 0, 1, 1], [], []>} : vector<128x48xf32>, vector<48x256xf32>, vector<128x256xf32> -> vector<128x256xf32>
    %c0_96 = arith.constant 0 : index
    %c0_97 = arith.constant 0 : index
    %c0_98 = arith.constant 0 : index
    %476 = vector.load %arg15[%c0_96, %c0_97, %c0_98] : memref<1x128x256xf32, #tpu.memory_space<vmem>>, vector<1x128x256xf32>
    %477 = vector.shape_cast %476 : vector<1x128x256xf32> to vector<128x256xf32>
    %478 = vector.shape_cast %475 : vector<128x256xf32> to vector<1x128x256xf32>
    tpu.vector_store %arg15[%c0_96, %c0_97, %c0_98], %478 {strides = array<i32>} : memref<1x128x256xf32, #tpu.memory_space<vmem>>, vector<1x128x256xf32>,
    return
  }
  func.func @transform_0(%arg0: i32) -> (i32, i32, i32) {
    %c0_i32 = arith.constant 0 : i32
    %c0_i32_0 = arith.constant 0 : i32
    %c0_i32_1 = arith.constant 0 : i32
    return %arg0, %c0_i32, %c0_i32_0 : i32, i32, i32
  }
  func.func @transform_1(%arg0: i32) -> (i32, i32, i32) {
    %c0_i32 = arith.constant 0 : i32
    %c0_i32_0 = arith.constant 0 : i32
    %c0_i32_1 = arith.constant 0 : i32
    %c0_i32_2 = arith.constant 0 : i32
    return %c0_i32, %c0_i32_0, %c0_i32_1 : i32, i32, i32
  }
  func.func @transform_2(%arg0: i32) -> (i32, i32) {
    %c0_i32 = arith.constant 0 : i32
    %c0_i32_0 = arith.constant 0 : i32
    %c0_i32_1 = arith.constant 0 : i32
    return %c0_i32, %c0_i32_0 : i32, i32
  }
  func.func @transform_3(%arg0: i32) -> (i32, i32, i32) {
    %c0_i32 = arith.constant 0 : i32
    %c0_i32_0 = arith.constant 0 : i32
    %c0_i32_1 = arith.constant 0 : i32
    %c0_i32_2 = arith.constant 0 : i32
    return %c0_i32, %c0_i32_0, %c0_i32_1 : i32, i32, i32
  }
  func.func @transform_4(%arg0: i32) -> (i32, i32, i32) {
    %c0_i32 = arith.constant 0 : i32
    %c0_i32_0 = arith.constant 0 : i32
    %c0_i32_1 = arith.constant 0 : i32
    %c0_i32_2 = arith.constant 0 : i32
    return %c0_i32, %c0_i32_0, %c0_i32_1 : i32, i32, i32
  }
  func.func @transform_5(%arg0: i32) -> (i32, i32, i32, i32) {
    %c0_i32 = arith.constant 0 : i32
    %c0_i32_0 = arith.constant 0 : i32
    %c0_i32_1 = arith.constant 0 : i32
    %c0_i32_2 = arith.constant 0 : i32
    %c0_i32_3 = arith.constant 0 : i32
    return %c0_i32, %c0_i32_0, %c0_i32_1, %c0_i32_2 : i32, i32, i32, i32
  }
  func.func @transform_6(%arg0: i32) -> (i32, i32, i32) {
    %c0_i32 = arith.constant 0 : i32
    %c0_i32_0 = arith.constant 0 : i32
    %c0_i32_1 = arith.constant 0 : i32
    %c0_i32_2 = arith.constant 0 : i32
    return %c0_i32, %c0_i32_0, %c0_i32_1 : i32, i32, i32
  }
  func.func @transform_7(%arg0: i32) -> (i32, i32, i32) {
    %c0_i32 = arith.constant 0 : i32
    %c0_i32_0 = arith.constant 0 : i32
    %c0_i32_1 = arith.constant 0 : i32
    %c0_i32_2 = arith.constant 0 : i32
    return %c0_i32, %c0_i32_0, %c0_i32_1 : i32, i32, i32
  }
  func.func @transform_8(%arg0: i32) -> (i32, i32, i32, i32) {
    %c0_i32 = arith.constant 0 : i32
    %c0_i32_0 = arith.constant 0 : i32
    %c0_i32_1 = arith.constant 0 : i32
    %c0_i32_2 = arith.constant 0 : i32
    %c0_i32_3 = arith.constant 0 : i32
    return %c0_i32, %c0_i32_0, %c0_i32_1, %c0_i32_2 : i32, i32, i32, i32
  }
  func.func @transform_9(%arg0: i32) -> (i32, i32, i32) {
    %c0_i32 = arith.constant 0 : i32
    %c0_i32_0 = arith.constant 0 : i32
    %c0_i32_1 = arith.constant 0 : i32
    %c0_i32_2 = arith.constant 0 : i32
    return %c0_i32, %c0_i32_0, %c0_i32_1 : i32, i32, i32
  }
  func.func @transform_10(%arg0: i32) -> (i32, i32, i32) {
    %c0_i32 = arith.constant 0 : i32
    %c0_i32_0 = arith.constant 0 : i32
    %c0_i32_1 = arith.constant 0 : i32
    %c0_i32_2 = arith.constant 0 : i32
    return %c0_i32, %c0_i32_0, %c0_i32_1 : i32, i32, i32
  }
  func.func @transform_11(%arg0: i32) -> (i32, i32, i32) {
    %c0_i32 = arith.constant 0 : i32
    %c0_i32_0 = arith.constant 0 : i32
    %c0_i32_1 = arith.constant 0 : i32
    %c0_i32_2 = arith.constant 0 : i32
    return %c0_i32, %c0_i32_0, %c0_i32_1 : i32, i32, i32
  }
  func.func @transform_12(%arg0: i32) -> (i32, i32) {
    %c0_i32 = arith.constant 0 : i32
    %c0_i32_0 = arith.constant 0 : i32
    %c0_i32_1 = arith.constant 0 : i32
    return %c0_i32, %c0_i32_0 : i32, i32
  }
  func.func @transform_13(%arg0: i32) -> (i32, i32, i32) {
    %c0_i32 = arith.constant 0 : i32
    %c0_i32_0 = arith.constant 0 : i32
    %c0_i32_1 = arith.constant 0 : i32
    %c0_i32_2 = arith.constant 0 : i32
    return %c0_i32, %c0_i32_0, %c0_i32_1 : i32, i32, i32
  }
  func.func @transform_14(%arg0: i32) -> (i32, i32, i32) {
    %c0_i32 = arith.constant 0 : i32
    %c0_i32_0 = arith.constant 0 : i32
    %c0_i32_1 = arith.constant 0 : i32
    return %arg0, %c0_i32, %c0_i32_0 : i32, i32, i32
  }
}

</mosaic_0001>

<llo_original>
// kernel: rfblock_forward.1
$region0: #{rfblock_forward.1}
  #allocation0 [shape = 'u32[]', space=smem, size = 0x4, offset = 0x4, fixed_abs, tag = 'smem constant byte address 0x4 - core index']
  #allocation1 [shape = 'u32[144,128]{1,0:T(1,128)}', space=vmem, size = 0x12000, scoped, tag = 'internal scratch']
  %s0 = inlined_call_operand.vmem [shape: f32[2,8,256], index: 0, kind: input, shape index: {}]
  %s1 = inlined_call_operand.vmem [shape: f32[2,8,1], index: 1, kind: input, shape index: {}]
  %s2 = inlined_call_operand.vmem [shape: f32[8,8], index: 2, kind: input, shape index: {}]
  %s3 = inlined_call_operand.vmem [shape: f32[6,8,1], index: 3, kind: input, shape index: {}]
  %s4 = inlined_call_operand.vmem [shape: f32[6,8,1], index: 4, kind: input, shape index: {}]
  %s5 = inlined_call_operand.vmem [shape: f32[4,3,8,1], index: 5, kind: input, shape index: {}]
  %s6 = inlined_call_operand.vmem [shape: f32[4,8,1], index: 6, kind: input, shape index: {}]
  %s7 = inlined_call_operand.vmem [shape: f32[4,8,1], index: 7, kind: input, shape index: {}]
  %s8 = inlined_call_operand.vmem [shape: f32[4,3,8,1], index: 8, kind: input, shape index: {}]
  %s9 = inlined_call_operand.vmem [shape: f32[9,8,1], index: 9, kind: input, shape index: {}]
  %s10 = inlined_call_operand.vmem [shape: f32[5,8,1], index: 10, kind: input, shape index: {}]
  %s11 = inlined_call_operand.vmem [shape: f32[5,8,1], index: 11, kind: input, shape index: {}]
  %s12 = inlined_call_operand.vmem [shape: f32[128,48], index: 12, kind: input, shape index: {}]
  %s13 = inlined_call_operand.vmem [shape: f32[4,2,256], index: 13, kind: input, shape index: {}]
  %s14 = inlined_call_operand.vmem [shape: f32[2,128,256], index: 14, kind: output, shape index: {}]
  %s15 = sld [smem:[#allocation0]]
  $region89: #{rfblock_forward.1} parent=0
    _
  %s17 = ssub.s32 1, %s15
  %s18 = scalar_select 0, %s17, %s15
  loop: start=0, step=1, limit=4
  $region2: #{rfblock_forward.1} parent=0 // loop_pre_header
    _
  $region3: #{rfblock_forward.1} parent=0 // loop_header
    %s20 = sphi 0, %s24
    %p21 = scmp.ge.s32.totalorder %s20, 4
    %s30 = sphi 0, %s32
    %s33 = sphi 0, %s30
    %s34 = sphi 0, %s33
    %s50 = sphi 0, %s34
    %s54 = sphi 0, %s54
    %s56 = sphi 0, %s54
    %s57 = sphi 0, %s56
    %s71 = sphi 0, %s57
    %s75 = sphi 0, %s75
    %s77 = sphi 0, %s75
    %s78 = sphi 0, %s77
    %s92 = sphi 0, %s78
    %s96 = sphi 0, %s96
    %s98 = sphi 0, %s96
    %s99 = sphi 0, %s98
    %s113 = sphi 0, %s99
    %s117 = sphi 0, %s117
    %s119 = sphi 0, %s117
    %s120 = sphi 0, %s119
    %s134 = sphi 0, %s120
    %s138 = sphi 0, %s138
    %s140 = sphi 0, %s138
    %s141 = sphi 0, %s140
    %s155 = sphi 0, %s141
    %s159 = sphi 0, %s159
    %s161 = sphi 0, %s159
    %s162 = sphi 0, %s161
    %s176 = sphi 0, %s162
    %s180 = sphi 0, %s180
    %s182 = sphi 0, %s180
    %s183 = sphi 0, %s182
    %s197 = sphi 0, %s183
    %s201 = sphi 0, %s201
    %s203 = sphi 0, %s201
    %s204 = sphi 0, %s203
    %s218 = sphi 0, %s204
    %s222 = sphi 0, %s222
    %s224 = sphi 0, %s222
    %s225 = sphi 0, %s224
    %s239 = sphi 0, %s225
    %s243 = sphi 0, %s243
    %s245 = sphi 0, %s243
    %s246 = sphi 0, %s245
    %s260 = sphi 0, %s246
    %s264 = sphi 0, %s264
    %s266 = sphi 0, %s264
    %s267 = sphi 0, %s266
    %s281 = sphi 0, %s267
    %s285 = sphi 0, %s285
    %s287 = sphi 0, %s285
    %s288 = sphi 0, %s287
    %s302 = sphi 0, %s288
    %s306 = sphi 0, %s306
    %s308 = sphi 0, %s306
    %s309 = sphi 0, %s308
    %s323 = sphi 0, %s309
    %s329 = sphi 0, %s331
    %s332 = sphi 0, %s329
    %s333 = sphi 0, %s332
    %s349 = sphi 0, %s333
  $region4: #{rfblock_forward.1} parent=0 // loop_header_branch
    %23 = sbr.rel (%p21) target = $region8
  $region5: #{rfblock_forward.1} parent=0 // loop_body
    %s25 = ssub.s32 %s20, 1
    %s26 = ssub.s32 %s20, 2
    %s27 = sadd.s32 %s20, 1
    %s28 = ssub.s32 %s20, %s27
    %p29 = scmp.eq.s32.totalorder %s28, 0
    %s31 = sadd.s32 %s30, 1
    %s32 = scalar_select %p29, %s30, %s31
    %p35 = pneg %p29
    %p36 = scmp.eq.s32.totalorder %s20, 1
    %p37 = por %p35, %p36
    %p38 = scmp.ne.s32.totalorder %s30, %s33
    %p39 = scmp.eq.s32.totalorder %s20, 0
    %p40 = por %p38, %p39
    %p41 = scmp.ne.s32.totalorder %s30, %s33
    %p42 = scmp.eq.s32.totalorder %s25, 1
    %p43 = por %p41, %p42
    %p44 = scmp.ne.s32.totalorder %s33, %s34
    %p45 = scmp.eq.s32.totalorder %s25, 0
    %p46 = por %p44, %p45
    %p47 = scmp.ne.s32.totalorder %s33, %s34
    %p48 = scmp.eq.s32.totalorder %s26, 1
    %p49 = por %p47, %p48
    %p51 = scmp.ne.s32.totalorder %s34, %s50
    %p52 = scmp.eq.s32.totalorder %s26, 0
    %p53 = por %p51, %p52
    %s55 = sadd.s32 %s54, 1
    %p58 = scmp.eq.s32.totalorder %s20, 1
    %p59 = scmp.ne.s32.totalorder %s54, %s56
    %p60 = scmp.eq.s32.totalorder %s20, 0
    %p61 = por %p59, %p60
    %p62 = scmp.ne.s32.totalorder %s54, %s56
    %p63 = scmp.eq.s32.totalorder %s25, 1
    %p64 = por %p62, %p63
    %p65 = scmp.ne.s32.totalorder %s56, %s57
    %p66 = scmp.eq.s32.totalorder %s25, 0
    %p67 = por %p65, %p66
    %p68 = scmp.ne.s32.totalorder %s56, %s57
    %p69 = scmp.eq.s32.totalorder %s26, 1
    %p70 = por %p68, %p69
    %p72 = scmp.ne.s32.totalorder %s57, %s71
    %p73 = scmp.eq.s32.totalorder %s26, 0
    %p74 = por %p72, %p73
    %s76 = sadd.s32 %s75, 1
    %p79 = scmp.eq.s32.totalorder %s20, 1
    %p80 = scmp.ne.s32.totalorder %s75, %s77
    %p81 = scmp.eq.s32.totalorder %s20, 0
    %p82 = por %p80, %p81
    %p83 = scmp.ne.s32.totalorder %s75, %s77
    %p84 = scmp.eq.s32.totalorder %s25, 1
    %p85 = por %p83, %p84
    %p86 = scmp.ne.s32.totalorder %s77, %s78
    %p87 = scmp.eq.s32.totalorder %s25, 0
    %p88 = por %p86, %p87
    %p89 = scmp.ne.s32.totalorder %s77, %s78
    %p90 = scmp.eq.s32.totalorder %s26, 1
    %p91 = por %p89, %p90
    %p93 = scmp.ne.s32.totalorder %s78, %s92
    %p94 = scmp.eq.s32.totalorder %s26, 0
    %p95 = por %p93, %p94
    %s97 = sadd.s32 %s96, 1
    %p100 = scmp.eq.s32.totalorder %s20, 1
    %p101 = scmp.ne.s32.totalorder %s96, %s98
    %p102 = scmp.eq.s32.totalorder %s20, 0
    %p103 = por %p101, %p102
    %p104 = scmp.ne.s32.totalorder %s96, %s98
    %p105 = scmp.eq.s32.totalorder %s25, 1
    %p106 = por %p104, %p105
    %p107 = scmp.ne.s32.totalorder %s98, %s99
    %p108 = scmp.eq.s32.totalorder %s25, 0
    %p109 = por %p107, %p108
    %p110 = scmp.ne.s32.totalorder %s98, %s99
    %p111 = scmp.eq.s32.totalorder %s26, 1
    %p112 = por %p110, %p111
    %p114 = scmp.ne.s32.totalorder %s99, %s113
    %p115 = scmp.eq.s32.totalorder %s26, 0
    %p116 = por %p114, %p115
    %s118 = sadd.s32 %s117, 1
    %p121 = scmp.eq.s32.totalorder %s20, 1
    %p122 = scmp.ne.s32.totalorder %s117, %s119
    %p123 = scmp.eq.s32.totalorder %s20, 0
    %p124 = por %p122, %p123
    %p125 = scmp.ne.s32.totalorder %s117, %s119
    %p126 = scmp.eq.s32.totalorder %s25, 1
    %p127 = por %p125, %p126
    %p128 = scmp.ne.s32.totalorder %s119, %s120
    %p129 = scmp.eq.s32.totalorder %s25, 0
    %p130 = por %p128, %p129
    %p131 = scmp.ne.s32.totalorder %s119, %s120
    %p132 = scmp.eq.s32.totalorder %s26, 1
    %p133 = por %p131, %p132
    %p135 = scmp.ne.s32.totalorder %s120, %s134
    %p136 = scmp.eq.s32.totalorder %s26, 0
    %p137 = por %p135, %p136
    %s139 = sadd.s32 %s138, 1
    %p142 = scmp.eq.s32.totalorder %s20, 1
    %p143 = scmp.ne.s32.totalorder %s138, %s140
    %p144 = scmp.eq.s32.totalorder %s20, 0
    %p145 = por %p143, %p144
    %p146 = scmp.ne.s32.totalorder %s138, %s140
    %p147 = scmp.eq.s32.totalorder %s25, 1
    %p148 = por %p146, %p147
    %p149 = scmp.ne.s32.totalorder %s140, %s141
    %p150 = scmp.eq.s32.totalorder %s25, 0
    %p151 = por %p149, %p150
    %p152 = scmp.ne.s32.totalorder %s140, %s141
    %p153 = scmp.eq.s32.totalorder %s26, 1
    %p154 = por %p152, %p153
    %p156 = scmp.ne.s32.totalorder %s141, %s155
    %p157 = scmp.eq.s32.totalorder %s26, 0
    %p158 = por %p156, %p157
    %s160 = sadd.s32 %s159, 1
    %p163 = scmp.eq.s32.totalorder %s20, 1
    %p164 = scmp.ne.s32.totalorder %s159, %s161
    %p165 = scmp.eq.s32.totalorder %s20, 0
    %p166 = por %p164, %p165
    %p167 = scmp.ne.s32.totalorder %s159, %s161
    %p168 = scmp.eq.s32.totalorder %s25, 1
    %p169 = por %p167, %p168
    %p170 = scmp.ne.s32.totalorder %s161, %s162
    %p171 = scmp.eq.s32.totalorder %s25, 0
    %p172 = por %p170, %p171
    %p173 = scmp.ne.s32.totalorder %s161, %s162
    %p174 = scmp.eq.s32.totalorder %s26, 1
    %p175 = por %p173, %p174
    %p177 = scmp.ne.s32.totalorder %s162, %s176
    %p178 = scmp.eq.s32.totalorder %s26, 0
    %p179 = por %p177, %p178
    %s181 = sadd.s32 %s180, 1
    %p184 = scmp.eq.s32.totalorder %s20, 1
    %p185 = scmp.ne.s32.totalorder %s180, %s182
    %p186 = scmp.eq.s32.totalorder %s20, 0
    %p187 = por %p185, %p186
    %p188 = scmp.ne.s32.totalorder %s180, %s182
    %p189 = scmp.eq.s32.totalorder %s25, 1
    %p190 = por %p188, %p189
    %p191 = scmp.ne.s32.totalorder %s182, %s183
    %p192 = scmp.eq.s32.totalorder %s25, 0
    %p193 = por %p191, %p192
    %p194 = scmp.ne.s32.totalorder %s182, %s183
    %p195 = scmp.eq.s32.totalorder %s26, 1
    %p196 = por %p194, %p195
    %p198 = scmp.ne.s32.totalorder %s183, %s197
    %p199 = scmp.eq.s32.totalorder %s26, 0
    %p200 = por %p198, %p199
    %s202 = sadd.s32 %s201, 1
    %p205 = scmp.eq.s32.totalorder %s20, 1
    %p206 = scmp.ne.s32.totalorder %s201, %s203
    %p207 = scmp.eq.s32.totalorder %s20, 0
    %p208 = por %p206, %p207
    %p209 = scmp.ne.s32.totalorder %s201, %s203
    %p210 = scmp.eq.s32.totalorder %s25, 1
    %p211 = por %p209, %p210
    %p212 = scmp.ne.s32.totalorder %s203, %s204
    %p213 = scmp.eq.s32.totalorder %s25, 0
    %p214 = por %p212, %p213
    %p215 = scmp.ne.s32.totalorder %s203, %s204
    %p216 = scmp.eq.s32.totalorder %s26, 1
    %p217 = por %p215, %p216
    %p219 = scmp.ne.s32.totalorder %s204, %s218
    %p220 = scmp.eq.s32.totalorder %s26, 0
    %p221 = por %p219, %p220
    %s223 = sadd.s32 %s222, 1
    %p226 = scmp.eq.s32.totalorder %s20, 1
    %p227 = scmp.ne.s32.totalorder %s222, %s224
    %p228 = scmp.eq.s32.totalorder %s20, 0
    %p229 = por %p227, %p228
    %p230 = scmp.ne.s32.totalorder %s222, %s224
    %p231 = scmp.eq.s32.totalorder %s25, 1
    %p232 = por %p230, %p231
    %p233 = scmp.ne.s32.totalorder %s224, %s225
    %p234 = scmp.eq.s32.totalorder %s25, 0
    %p235 = por %p233, %p234
    %p236 = scmp.ne.s32.totalorder %s224, %s225
    %p237 = scmp.eq.s32.totalorder %s26, 1
    %p238 = por %p236, %p237
    %p240 = scmp.ne.s32.totalorder %s225, %s239
    %p241 = scmp.eq.s32.totalorder %s26, 0
    %p242 = por %p240, %p241
    %s244 = sadd.s32 %s243, 1
    %p247 = scmp.eq.s32.totalorder %s20, 1
    %p248 = scmp.ne.s32.totalorder %s243, %s245
    %p249 = scmp.eq.s32.totalorder %s20, 0
    %p250 = por %p248, %p249
    %p251 = scmp.ne.s32.totalorder %s243, %s245
    %p252 = scmp.eq.s32.totalorder %s25, 1
    %p253 = por %p251, %p252
    %p254 = scmp.ne.s32.totalorder %s245, %s246
    %p255 = scmp.eq.s32.totalorder %s25, 0
    %p256 = por %p254, %p255
    %p257 = scmp.ne.s32.totalorder %s245, %s246
    %p258 = scmp.eq.s32.totalorder %s26, 1
    %p259 = por %p257, %p258
    %p261 = scmp.ne.s32.totalorder %s246, %s260
    %p262 = scmp.eq.s32.totalorder %s26, 0
    %p263 = por %p261, %p262
    %s265 = sadd.s32 %s264, 1
    %p268 = scmp.eq.s32.totalorder %s20, 1
    %p269 = scmp.ne.s32.totalorder %s264, %s266
    %p270 = scmp.eq.s32.totalorder %s20, 0
    %p271 = por %p269, %p270
    %p272 = scmp.ne.s32.totalorder %s264, %s266
    %p273 = scmp.eq.s32.totalorder %s25, 1
    %p274 = por %p272, %p273
    %p275 = scmp.ne.s32.totalorder %s266, %s267
    %p276 = scmp.eq.s32.totalorder %s25, 0
    %p277 = por %p275, %p276
    %p278 = scmp.ne.s32.totalorder %s266, %s267
    %p279 = scmp.eq.s32.totalorder %s26, 1
    %p280 = por %p278, %p279
    %p282 = scmp.ne.s32.totalorder %s267, %s281
    %p283 = scmp.eq.s32.totalorder %s26, 0
    %p284 = por %p282, %p283
    %s286 = sadd.s32 %s285, 1
    %p289 = scmp.eq.s32.totalorder %s20, 1
    %p290 = scmp.ne.s32.totalorder %s285, %s287
    %p291 = scmp.eq.s32.totalorder %s20, 0
    %p292 = por %p290, %p291
    %p293 = scmp.ne.s32.totalorder %s285, %s287
    %p294 = scmp.eq.s32.totalorder %s25, 1
    %p295 = por %p293, %p294
    %p296 = scmp.ne.s32.totalorder %s287, %s288
    %p297 = scmp.eq.s32.totalorder %s25, 0
    %p298 = por %p296, %p297
    %p299 = scmp.ne.s32.totalorder %s287, %s288
    %p300 = scmp.eq.s32.totalorder %s26, 1
    %p301 = por %p299, %p300
    %p303 = scmp.ne.s32.totalorder %s288, %s302
    %p304 = scmp.eq.s32.totalorder %s26, 0
    %p305 = por %p303, %p304
    %s307 = sadd.s32 %s306, 1
    %p310 = scmp.eq.s32.totalorder %s20, 1
    %p311 = scmp.ne.s32.totalorder %s306, %s308
    %p312 = scmp.eq.s32.totalorder %s20, 0
    %p313 = por %p311, %p312
    %p314 = scmp.ne.s32.totalorder %s306, %s308
    %p315 = scmp.eq.s32.totalorder %s25, 1
    %p316 = por %p314, %p315
    %p317 = scmp.ne.s32.totalorder %s308, %s309
    %p318 = scmp.eq.s32.totalorder %s25, 0
    %p319 = por %p317, %p318
    %p320 = scmp.ne.s32.totalorder %s308, %s309
    %p321 = scmp.eq.s32.totalorder %s26, 1
    %p322 = por %p320, %p321
    %p324 = scmp.ne.s32.totalorder %s309, %s323
    %p325 = scmp.eq.s32.totalorder %s26, 0
    %p326 = por %p324, %p325
    %s327 = ssub.s32 %s20, %s27
    %p328 = scmp.eq.s32.totalorder %s327, 0
    %s330 = sadd.s32 %s329, 1
    %s331 = scalar_select %p328, %s329, %s330
    %p334 = pneg %p328
    %p335 = scmp.eq.s32.totalorder %s20, 1
    %p336 = por %p334, %p335
    %p337 = scmp.ne.s32.totalorder %s329, %s332
    %p338 = scmp.eq.s32.totalorder %s20, 0
    %p339 = por %p337, %p338
    %p340 = scmp.ne.s32.totalorder %s329, %s332
    %p341 = scmp.eq.s32.totalorder %s25, 1
    %p342 = por %p340, %p341
    %p343 = scmp.ne.s32.totalorder %s332, %s333
    %p344 = scmp.eq.s32.totalorder %s25, 0
    %p345 = por %p343, %p344
    %p346 = scmp.ne.s32.totalorder %s332, %s333
    %p347 = scmp.eq.s32.totalorder %s26, 1
    %p348 = por %p346, %p347
    %p350 = scmp.ne.s32.totalorder %s333, %s349
    %p351 = scmp.eq.s32.totalorder %s26, 0
    %p352 = por %p350, %p351
    %p353 = scmp.le.s32.totalorder 1, %s20
    %p354 = scmp.lt.s32.totalorder %s20, 3
    %p355 = pnand %p353, %p354
    %p356 = pneg %p355
    // Predicated region
    $region9: #{rfblock_forward.1} parent=5 // pred_check
      _
    $region10: #{rfblock_forward.1} parent=5 // pred_check_branch
      %358 = sbr.rel (%p355) target = $region12
    $region11: #{rfblock_forward.1} parent=5 // pred_region
      %s359 = ssub.s32 %s20, 1
      // Predicated region
      $region13: #{rfblock_forward.1} parent=11 // pred_check
        %p360 = pneg %p67
      $region14: #{rfblock_forward.1} parent=11 // pred_check_branch
        %362 = sbr.rel (%p360) target = $region16
      $region15: #{rfblock_forward.1} parent=11 // pred_region
        _
      $region16: #{rfblock_forward.1} parent=11 // pred_fallthru
        _
      // Predicated region
      $region17: #{rfblock_forward.1} parent=11 // pred_check
        %p363 = pneg %p88
      $region18: #{rfblock_forward.1} parent=11 // pred_check_branch
        %365 = sbr.rel (%p363) target = $region20
      $region19: #{rfblock_forward.1} parent=11 // pred_region
        _
      $region20: #{rfblock_forward.1} parent=11 // pred_fallthru
        _
      // Predicated region
      $region21: #{rfblock_forward.1} parent=11 // pred_check
        %p366 = pneg %p109
      $region22: #{rfblock_forward.1} parent=11 // pred_check_branch
        %368 = sbr.rel (%p366) target = $region24
      $region23: #{rfblock_forward.1} parent=11 // pred_region
        _
      $region24: #{rfblock_forward.1} parent=11 // pred_fallthru
        _
      // Predicated region
      $region25: #{rfblock_forward.1} parent=11 // pred_check
        %p369 = pneg %p130
      $region26: #{rfblock_forward.1} parent=11 // pred_check_branch
        %371 = sbr.rel (%p369) target = $region28
      $region27: #{rfblock_forward.1} parent=11 // pred_region
        _
      $region28: #{rfblock_forward.1} parent=11 // pred_fallthru
        _
      // Predicated region
      $region29: #{rfblock_forward.1} parent=11 // pred_check
        %p372 = pneg %p151
      $region30: #{rfblock_forward.1} parent=11 // pred_check_branch
        %374 = sbr.rel (%p372) target = $region32
      $region31: #{rfblock_forward.1} parent=11 // pred_region
        _
      $region32: #{rfblock_forward.1} parent=11 // pred_fallthru
        _
      // Predicated region
      $region33: #{rfblock_forward.1} parent=11 // pred_check
        %p375 = pneg %p172
      $region34: #{rfblock_forward.1} parent=11 // pred_check_branch
        %377 = sbr.rel (%p375) target = $region36
      $region35: #{rfblock_forward.1} parent=11 // pred_region
        _
      $region36: #{rfblock_forward.1} parent=11 // pred_fallthru
        _
      // Predicated region
      $region37: #{rfblock_forward.1} parent=11 // pred_check
        %p378 = pneg %p193
      $region38: #{rfblock_forward.1} parent=11 // pred_check_branch
        %380 = sbr.rel (%p378) target = $region40
      $region39: #{rfblock_forward.1} parent=11 // pred_region
        _
      $region40: #{rfblock_forward.1} parent=11 // pred_fallthru
        _
      // Predicated region
      $region41: #{rfblock_forward.1} parent=11 // pred_check
        %p381 = pneg %p214
      $region42: #{rfblock_forward.1} parent=11 // pred_check_branch
        %383 = sbr.rel (%p381) target = $region44
      $region43: #{rfblock_forward.1} parent=11 // pred_region
        _
      $region44: #{rfblock_forward.1} parent=11 // pred_fallthru
        _
      // Predicated region
      $region45: #{rfblock_forward.1} parent=11 // pred_check
        %p384 = pneg %p235
      $region46: #{rfblock_forward.1} parent=11 // pred_check_branch
        %386 = sbr.rel (%p384) target = $region48
      $region47: #{rfblock_forward.1} parent=11 // pred_region
        _
      $region48: #{rfblock_forward.1} parent=11 // pred_fallthru
        _
      // Predicated region
      $region49: #{rfblock_forward.1} parent=11 // pred_check
        %p387 = pneg %p256
      $region50: #{rfblock_forward.1} parent=11 // pred_check_branch
        %389 = sbr.rel (%p387) target = $region52
      $region51: #{rfblock_forward.1} parent=11 // pred_region
        _
      $region52: #{rfblock_forward.1} parent=11 // pred_fallthru
        _
      // Predicated region
      $region53: #{rfblock_forward.1} parent=11 // pred_check
        %p390 = pneg %p277
      $region54: #{rfblock_forward.1} parent=11 // pred_check_branch
        %392 = sbr.rel (%p390) target = $region56
      $region55: #{rfblock_forward.1} parent=11 // pred_region
        _
      $region56: #{rfblock_forward.1} parent=11 // pred_fallthru
        _
      // Predicated region
      $region57: #{rfblock_forward.1} parent=11 // pred_check
        %p393 = pneg %p298
      $region58: #{rfblock_forward.1} parent=11 // pred_check_branch
        %395 = sbr.rel (%p393) target = $region60
      $region59: #{rfblock_forward.1} parent=11 // pred_region
        _
      $region60: #{rfblock_forward.1} parent=11 // pred_fallthru
        _
      // Predicated region
      $region61: #{rfblock_forward.1} parent=11 // pred_check
        %p396 = pneg %p319
      $region62: #{rfblock_forward.1} parent=11 // pred_check_branch
        %398 = sbr.rel (%p396) target = $region64
      $region63: #{rfblock_forward.1} parent=11 // pred_region
        _
      $region64: #{rfblock_forward.1} parent=11 // pred_fallthru
        _
    $region12: #{rfblock_forward.1} parent=5 // pred_fallthru
      _
    %p399 = scmp.lt.s32.totalorder %s20, 2
    // Predicated region
    $region65: #{rfblock_forward.1} parent=5 // pred_check
      %p400 = pneg %p399
    $region66: #{rfblock_forward.1} parent=5 // pred_check_branch
      %402 = sbr.rel (%p400) target = $region68
    $region67: #{rfblock_forward.1} parent=5 // pred_region
      // Predicated region
      $region69: #{rfblock_forward.1} parent=67 // pred_check
        %p403 = pneg %p40
      $region70: #{rfblock_forward.1} parent=67 // pred_check_branch
        %405 = sbr.rel (%p403) target = $region72
      $region71: #{rfblock_forward.1} parent=67 // pred_region
        %p406 = scmp.lt.s32.totalorder %s20, 1
        %s407 = scalar_select %p406, %s20, 1
        %s408 = smul.addr %s407, 2
        %s409 = smul.addr %s408, 8
        %s410 = scalar_lea.vmem %s0, %s409
      $region72: #{rfblock_forward.1} parent=67 // pred_fallthru
        _
    $region68: #{rfblock_forward.1} parent=5 // pred_fallthru
      _
    %p411 = scmp.le.s32.totalorder 1, %s20
    %p412 = scmp.lt.s32.totalorder %s20, 3
    %p413 = pnand %p411, %p412
    %p414 = pneg %p413
    // Predicated region
    $region73: #{rfblock_forward.1} parent=5 // pred_check
      _
    $region74: #{rfblock_forward.1} parent=5 // pred_check_branch
      %416 = sbr.rel (%p413) target = $region76
    $region75: #{rfblock_forward.1} parent=5 // pred_region
      %s417 = ssub.s32 %s20, 1
      %p418 = scmp.lt.s32.totalorder %s25, 1
      %s419 = scalar_select %p418, %s25, 1
      %s420 = smul.addr %s419, 2
      %s421 = smul.addr %s420, 8
      %s422 = scalar_lea.vmem %s0, %s421
      %p423 = pneg %p46
      %p424 = pneg %p43
      %p425 = pneg %p67
      %p426 = pneg %p64
      %p427 = pneg %p88
      %p428 = pneg %p85
      %p429 = pneg %p109
      %p430 = pneg %p106
      %p431 = pneg %p130
      %p432 = pneg %p127
      %p433 = pneg %p151
      %p434 = pneg %p148
      %p435 = pneg %p172
      %p436 = pneg %p169
      %p437 = pneg %p193
      %p438 = pneg %p190
      %p439 = pneg %p214
      %p440 = pneg %p211
      %p441 = pneg %p235
      %p442 = pneg %p232
      %p443 = pneg %p256
      %p444 = pneg %p253
      %p445 = pneg %p277
      %p446 = pneg %p274
      %p447 = pneg %p298
      %p448 = pneg %p295
      %p449 = pneg %p319
      %p450 = pneg %p316
      %p451 = pneg %p345
      %p452 = pneg %p342
      %p453 = scmp.lt.s32.totalorder %s25, 1
      %s454 = scalar_select %p453, %s25, 1
      %s455 = smul.addr %s454, 32
      %s456 = smul.addr %s455, 8
      %s457 = scalar_lea.vmem %s14, %s456
      %p458 = scmp.lt.s32.totalorder %s25, 1
      %s459 = scalar_select %p458, %s25, 1
      %s460 = smul.addr %s459, 2
      %s461 = smul.addr %s460, 8
      %s462 = scalar_lea.vmem %s0, %s461
      %p463 = scmp.lt.s32.totalorder %s25, 1
      %s464 = scalar_select %p463, %s25, 1
      %s465 = smul.addr %s464, 32
      %s466 = smul.addr %s465, 8
      %s467 = scalar_lea.vmem %s14, %s466
      %v468 = vld [vmem:[%s13] sm:$0xf]
      %v469 = vld [vmem:[%s13 + $0x4] sm:$0xf]
      %v470 = vld [vmem:[%s13 + $0x8] sm:$0xf]
      %v471 = vld [vmem:[%s13 + $0xc] sm:$0xf]
      %v472 = vld [vmem:[%s1] sm:$0xff]
      %v473 = vld [vmem:[%s1 + $0x8] sm:$0xff]
      %v474 = vld [vmem:[%s462] sm:$0xff]
      %v475 = vld [vmem:[%s462 + $0x8] sm:$0xff]
      %477 = vset.pattern.permute.xlu0 0
      %478 = vperm.xlu0 %477, %v472
      %v479 = vpop.permute.xlu0 %478
      %v481 = vmul.f32 %v474, %v479
      %v482 = vmul.f32 %v475, %v479
      %484 = vset.pattern.permute.xlu0 0
      %485 = vperm.xlu0 %484, %v473
      %v486 = vpop.permute.xlu0 %485
      %v488 = vadd.f32 %v481, %v486
      %v489 = vadd.f32 %v482, %v486
      %vm490 = vcmp.gt.f32.partialorder %v488, 0.0
      %vm491 = vcmp.gt.f32.partialorder %v489, 0.0
      %v492 = vmul.f32 %v488, 0.1
      %v493 = vmul.f32 %v489, 0.1
      %v494 = vsel %vm490, %v488, %v492
      %v495 = vsel %vm491, %v489, %v493
      %v496 = vld [vmem:[%s2] sm:$0xff]
      %vm497 = vcmask 64512
      %v499 = vsel %vm497, %v496, 0
      %501 = vmatprep.subr.mxu0 %v495
      %502 = vmatpush1.msra.mxu0 %v494
      %503 = vmatprep.subr.mxu0 0.0
      %504 = vmatpush1.msra.mxu0 0.0
      %505 = vmatprep.subr.mxu0 0.0
      %506 = vmatpush1.msra.mxu0 0.0
      %507 = vmatprep.subr.mxu0 0.0
      %508 = vmatpush1.msra.mxu0 0.0
      %509 = vmatprep.subr.mxu0 0.0
      %510 = vmatpush1.msra.mxu0 0.0
      %511 = vmatprep.subr.mxu0 0.0
      %512 = vmatpush1.msra.mxu0 0.0
      %513 = vmatprep.subr.mxu0 0.0
      %514 = vmatpush1.msra.mxu0 0.0
      %515 = vmatprep.subr.mxu0 0.0
      %516 = vmatpush1.msra.mxu0 0.0
      %517 = vmatprep.subr.mxu0 0.0
      %518 = vmatpush1.msra.mxu0 0.0
      %519 = vmatprep.subr.mxu0 0.0
      %520 = vmatpush1.msra.mxu0 0.0
      %521 = vmatprep.subr.mxu0 0.0
      %522 = vmatpush1.msra.mxu0 0.0
      %523 = vmatprep.subr.mxu0 0.0
      %524 = vmatpush1.msra.mxu0 0.0
      %525 = vmatprep.subr.mxu0 0.0
      %526 = vmatpush1.msra.mxu0 0.0
      %527 = vmatprep.subr.mxu0 0.0
      %528 = vmatpush1.msra.mxu0 0.0
      %529 = vmatprep.subr.mxu0 0.0
      %530 = vmatpush1.msra.mxu0 0.0
      %531 = vmatprep.subr.mxu0 0.0
      %532 = vmatpush1.msra.mxu0 0.0
      %533 = vmatprep.subr.mxu0 0.0
      %534 = vmatpush1.msra.mxu0 0.0
      %535 = vmatprep.subr.mxu0 0.0
      %536 = vmatpush1.msra.mxu0 0.0
      %537 = vmatprep.subr.mxu0 0.0
      %538 = vmatpush1.msra.mxu0 0.0
      %539 = vmatprep.subr.mxu0 0.0
      %540 = vmatpush1.msra.mxu0 0.0
      %541 = vmatprep.subr.mxu0 0.0
      %542 = vmatpush1.msra.mxu0 0.0
      %543 = vmatprep.subr.mxu0 0.0
      %544 = vmatpush1.msra.mxu0 0.0
      %545 = vmatprep.subr.mxu0 0.0
      %546 = vmatpush1.msra.mxu0 0.0
      %547 = vmatprep.subr.mxu0 0.0
      %548 = vmatpush1.msra.mxu0 0.0
      %549 = vmatprep.subr.mxu0 0.0
      %550 = vmatpush1.msra.mxu0 0.0
      %551 = vmatprep.subr.mxu0 0.0
      %552 = vmatpush1.msra.mxu0 0.0
      %553 = vmatprep.subr.mxu0 0.0
      %554 = vmatpush1.msra.mxu0 0.0
      %555 = vmatprep.subr.mxu0 0.0
      %556 = vmatpush1.msra.mxu0 0.0
      %557 = vmatprep.subr.mxu0 0.0
      %558 = vmatpush1.msra.mxu0 0.0
      %559 = vmatprep.subr.mxu0 0.0
      %560 = vmatpush1.msra.mxu0 0.0
      %561 = vmatprep.subr.mxu0 0.0
      %562 = vmatpush1.msra.mxu0 0.0
      %563 = vmatprep.subr.mxu0 0.0
      %564 = vmatpush1.msra.mxu0 0.0
      %565 = vmatprep.mubr.f32.mxu0 0.0
      %566 = vmatmul.mubr.f32.gmra.mrb[0].mxu0 %v499
      %v567 = vpop.f32.mrb[0].mxu0
      %v568 = vadd.f32 0.0, %v567
      %v569 = vpop.f32.mrb[0].mxu0
      %v570 = vadd.f32 0.0, %v569
      %571 = vdwg.mxu0
      %v572 = vld [vmem:[%s3] sm:$0xff]
      %v573 = vld [vmem:[%s3 + $0x8] sm:$0xff]
      %v574 = vld [vmem:[%s3 + $0x10] sm:$0xff]
      %v575 = vld [vmem:[%s3 + $0x18] sm:$0xff]
      %v576 = vld [vmem:[%s3 + $0x20] sm:$0xff]
      %v577 = vld [vmem:[%s3 + $0x28] sm:$0xff]
      %v578 = vld [vmem:[%s4] sm:$0xff]
      %v579 = vld [vmem:[%s4 + $0x8] sm:$0xff]
      %v580 = vld [vmem:[%s4 + $0x10] sm:$0xff]
      %v581 = vld [vmem:[%s4 + $0x18] sm:$0xff]
      %v582 = vld [vmem:[%s4 + $0x20] sm:$0xff]
      %v583 = vld [vmem:[%s4 + $0x28] sm:$0xff]
      %v584 = vld [vmem:[%s6] sm:$0xff]
      %v585 = vld [vmem:[%s6 + $0x8] sm:$0xff]
      %v586 = vld [vmem:[%s6 + $0x10] sm:$0xff]
      %v587 = vld [vmem:[%s6 + $0x18] sm:$0xff]
      %v588 = vld [vmem:[%s7] sm:$0xff]
      %v589 = vld [vmem:[%s7 + $0x8] sm:$0xff]
      %v590 = vld [vmem:[%s7 + $0x10] sm:$0xff]
      %v591 = vld [vmem:[%s7 + $0x18] sm:$0xff]
      %v592 = vld [vmem:[%s10] sm:$0xff]
      %v593 = vld [vmem:[%s10 + $0x8] sm:$0xff]
      %v594 = vld [vmem:[%s10 + $0x10] sm:$0xff]
      %v595 = vld [vmem:[%s10 + $0x18] sm:$0xff]
      %v596 = vld [vmem:[%s10 + $0x20] sm:$0xff]
      %v597 = vld [vmem:[%s11] sm:$0xff]
      %v598 = vld [vmem:[%s11 + $0x8] sm:$0xff]
      %v599 = vld [vmem:[%s11 + $0x10] sm:$0xff]
      %v600 = vld [vmem:[%s11 + $0x18] sm:$0xff]
      %v601 = vld [vmem:[%s11 + $0x20] sm:$0xff]
      %v602 = vld [vmem:[%s5] sm:$0xff]
      %v603 = vld [vmem:[%s5 + $0x8] sm:$0xff]
      %v604 = vld [vmem:[%s5 + $0x10] sm:$0xff]
      %v605 = vld [vmem:[%s5 + $0x18] sm:$0xff]
      %v606 = vld [vmem:[%s5 + $0x20] sm:$0xff]
      %v607 = vld [vmem:[%s5 + $0x28] sm:$0xff]
      %v608 = vld [vmem:[%s5 + $0x30] sm:$0xff]
      %v609 = vld [vmem:[%s5 + $0x38] sm:$0xff]
      %v610 = vld [vmem:[%s5 + $0x40] sm:$0xff]
      %v611 = vld [vmem:[%s5 + $0x50] sm:$0xff]
      %v612 = vld [vmem:[%s8] sm:$0xff]
      %v613 = vld [vmem:[%s8 + $0x8] sm:$0xff]
      %v614 = vld [vmem:[%s8 + $0x10] sm:$0xff]
      %v615 = vld [vmem:[%s8 + $0x18] sm:$0xff]
      %v616 = vld [vmem:[%s8 + $0x20] sm:$0xff]
      %v617 = vld [vmem:[%s8 + $0x28] sm:$0xff]
      %v618 = vld [vmem:[%s8 + $0x30] sm:$0xff]
      %v619 = vld [vmem:[%s8 + $0x38] sm:$0xff]
      %v620 = vld [vmem:[%s8 + $0x40] sm:$0xff]
      %v621 = vld [vmem:[%s8 + $0x50] sm:$0xff]
      %v622 = vld [vmem:[%s9] sm:$0xff]
      %v623 = vld [vmem:[%s9 + $0x8] sm:$0xff]
      %v624 = vld [vmem:[%s9 + $0x10] sm:$0xff]
      %v625 = vld [vmem:[%s9 + $0x18] sm:$0xff]
      %v626 = vld [vmem:[%s9 + $0x20] sm:$0xff]
      %v627 = vld [vmem:[%s9 + $0x28] sm:$0xff]
      %v628 = vld [vmem:[%s9 + $0x30] sm:$0xff]
      %v629 = vld [vmem:[%s9 + $0x38] sm:$0xff]
      %v630 = vld [vmem:[%s9 + $0x40] sm:$0xff]
      %632 = vset.pattern.permute.xlu0 0
      %633 = vperm.xlu0 %632, %v572
      %v634 = vpop.permute.xlu0 %633
      %v636 = vmul.f32 %v568, %v634
      %v637 = vmul.f32 %v570, %v634
      %639 = vset.pattern.permute.xlu0 0
      %640 = vperm.xlu0 %639, %v578
      %v641 = vpop.permute.xlu0 %640
      %v643 = vadd.f32 %v636, %v641
      %v644 = vadd.f32 %v637, %v641
      %vm645 = vcmp.gt.f32.partialorder %v643, 0.0
      %vm646 = vcmp.gt.f32.partialorder %v644, 0.0
      %v647 = vmul.f32 %v643, 0.1
      %v648 = vmul.f32 %v644, 0.1
      %v649 = vsel %vm645, %v643, %v647
      %v650 = vsel %vm646, %v644, %v648
      %652 = vset.pattern.permute.xlu0 0
      %653 = vperm.xlu0 %652, %v603
      %v654 = vpop.permute.xlu0 %653
      %v656 = vmul.f32 %v654, %v649
      %v657 = vmul.f32 %v654, %v650
      %660 = vrot.lane.b32.xlu0 %v649, 48
      %v661 = vpop.permute.xlu0 %660
      %662 = vrot.lane.b32.xlu0 %v650, 48
      %v663 = vpop.permute.xlu0 %662
      %vm664 = vcmask 392192
      %v665 = vsel %vm664, %v661, %v663
      %v668 = vsel %vm664, 0.0, %v661
      %670 = vset.pattern.permute.xlu0 0
      %671 = vperm.xlu0 %670, %v602
      %v672 = vpop.permute.xlu0 %671
      %v674 = vmul.f32 %v672, %v668
      %v675 = vmul.f32 %v672, %v665
      %v676 = vadd.f32 %v656, %v674
      %v677 = vadd.f32 %v657, %v675
      %678 = vrot.lane.b32.xlu0 %v649, 80
      %v679 = vpop.permute.xlu0 %678
      %680 = vrot.lane.b32.xlu0 %v650, 80
      %v681 = vpop.permute.xlu0 %680
      %vm682 = vcmask 654336
      %v683 = vsel %vm682, %v679, %v681
      %v686 = vsel %vm682, %v681, 0.0
      %688 = vset.pattern.permute.xlu0 0
      %689 = vperm.xlu0 %688, %v604
      %v690 = vpop.permute.xlu0 %689
      %v692 = vmul.f32 %v690, %v683
      %v693 = vmul.f32 %v690, %v686
      %v694 = vadd.f32 %v676, %v692
      %v695 = vadd.f32 %v677, %v693
      %697 = vset.pattern.permute.xlu0 0
      %698 = vperm.xlu0 %697, %v584
      %v699 = vpop.permute.xlu0 %698
      %v701 = vmul.f32 %v694, %v699
      %v702 = vmul.f32 %v695, %v699
      %704 = vset.pattern.permute.xlu0 0
      %705 = vperm.xlu0 %704, %v588
      %v706 = vpop.permute.xlu0 %705
      %v708 = vadd.f32 %v701, %v706
      %v709 = vadd.f32 %v702, %v706
      %vm710 = vcmp.gt.f32.partialorder %v708, 0.0
      %vm711 = vcmp.gt.f32.partialorder %v709, 0.0
      %v712 = vmul.f32 %v708, 0.1
      %v713 = vmul.f32 %v709, 0.1
      %v714 = vsel %vm710, %v708, %v712
      %v715 = vsel %vm711, %v709, %v713
      %717 = vset.pattern.permute.xlu0 0
      %718 = vperm.xlu0 %717, %v613
      %v719 = vpop.permute.xlu0 %718
      %v721 = vmul.f32 %v719, %v714
      %v722 = vmul.f32 %v719, %v715
      %725 = vrot.lane.b32.xlu0 %v714, 3
      %v726 = vpop.permute.xlu0 %725
      %727 = vrot.lane.b32.xlu0 %v715, 3
      %v728 = vpop.permute.xlu0 %727
      %vm729 = vcmask 23552
      %v730 = vsel %vm729, %v726, %v728
      %v733 = vsel %vm729, 0.0, %v726
      %v735 = vlaneseq
      %v736 = vshrl.u32 %v735, 7
      %v737 = vsub.s32 0, %v736
      %v738 = vrot.slane %v469, %v737
      %v739 = vlaneseq
      %v740 = vshrl.u32 %v739, 7
      %v741 = vsub.s32 2, %v740
      %v742 = vrot.slane %v469, %v741
      %v745 = vlaneseq
      %v746 = vshrl.u32 %v745, 7
      %v747 = vsub.s32 0, %v746
      %v748 = vrot.slane %v738, %v747
      %v749 = vlaneseq
      %v750 = vshrl.u32 %v749, 7
      %v751 = vsub.s32 0, %v750
      %v752 = vrot.slane %v742, %v751
      %v753 = vmul.f32 %v733, %v748
      %v754 = vmul.f32 %v730, %v752
      %756 = vset.pattern.permute.xlu0 0
      %757 = vperm.xlu0 %756, %v612
      %v758 = vpop.permute.xlu0 %757
      %v760 = vmul.f32 %v758, %v753
      %v761 = vmul.f32 %v758, %v754
      %v762 = vadd.f32 %v721, %v760
      %v763 = vadd.f32 %v722, %v761
      %764 = vrot.lane.b32.xlu0 %v714, 125
      %v765 = vpop.permute.xlu0 %764
      %766 = vrot.lane.b32.xlu0 %v715, 125
      %v767 = vpop.permute.xlu0 %766
      %vm768 = vcmask 1022976
      %v769 = vsel %vm768, %v765, %v767
      %v772 = vsel %vm768, %v767, 0.0
      %v773 = vlaneseq
      %v774 = vshrl.u32 %v773, 7
      %v775 = vsub.s32 1, %v774
      %v776 = vrot.slane %v469, %v775
      %v777 = vlaneseq
      %v778 = vshrl.u32 %v777, 7
      %v779 = vsub.s32 3, %v778
      %v780 = vrot.slane %v469, %v779
      %v783 = vlaneseq
      %v784 = vshrl.u32 %v783, 7
      %v785 = vsub.s32 1, %v784
      %v786 = vrot.slane %v776, %v785
      %v787 = vlaneseq
      %v788 = vshrl.u32 %v787, 7
      %v789 = vsub.s32 1, %v788
      %v790 = vrot.slane %v780, %v789
      %v791 = vmul.f32 %v769, %v786
      %v792 = vmul.f32 %v772, %v790
      %794 = vset.pattern.permute.xlu0 0
      %795 = vperm.xlu0 %794, %v614
      %v796 = vpop.permute.xlu0 %795
      %v798 = vmul.f32 %v796, %v791
      %v799 = vmul.f32 %v796, %v792
      %v800 = vadd.f32 %v762, %v798
      %v801 = vadd.f32 %v763, %v799
      %803 = vset.pattern.permute.xlu0 0
      %804 = vperm.xlu0 %803, %v592
      %v805 = vpop.permute.xlu0 %804
      %v807 = vmul.f32 %v800, %v805
      %v808 = vmul.f32 %v801, %v805
      %810 = vset.pattern.permute.xlu0 0
      %811 = vperm.xlu0 %810, %v597
      %v812 = vpop.permute.xlu0 %811
      %v814 = vadd.f32 %v807, %v812
      %v815 = vadd.f32 %v808, %v812
      %vm816 = vcmp.gt.f32.partialorder %v814, 0.0
      %vm817 = vcmp.gt.f32.partialorder %v815, 0.0
      %v818 = vmul.f32 %v814, 0.1
      %v819 = vmul.f32 %v815, 0.1
      %v820 = vsel %vm816, %v814, %v818
      %v821 = vsel %vm817, %v815, %v819
      %823 = vset.pattern.permute.xlu0 0
      %824 = vperm.xlu0 %823, %v573
      %v825 = vpop.permute.xlu0 %824
      %v827 = vmul.f32 %v568, %v825
      %v828 = vmul.f32 %v570, %v825
      %830 = vset.pattern.permute.xlu0 0
      %831 = vperm.xlu0 %830, %v579
      %v832 = vpop.permute.xlu0 %831
      %v834 = vadd.f32 %v827, %v832
      %v835 = vadd.f32 %v828, %v832
      %vm836 = vcmp.gt.f32.partialorder %v834, 0.0
      %vm837 = vcmp.gt.f32.partialorder %v835, 0.0
      %v838 = vmul.f32 %v834, 0.1
      %v839 = vmul.f32 %v835, 0.1
      %v840 = vsel %vm836, %v834, %v838
      %v841 = vsel %vm837, %v835, %v839
      %843 = vset.pattern.permute.xlu0 0
      %844 = vperm.xlu0 %843, %v606
      %v845 = vpop.permute.xlu0 %844
      %v847 = vmul.f32 %v845, %v840
      %v848 = vmul.f32 %v845, %v841
      %851 = vrot.lane.b32.xlu0 %v840, 96
      %v852 = vpop.permute.xlu0 %851
      %853 = vrot.lane.b32.xlu0 %v841, 96
      %v854 = vpop.permute.xlu0 %853
      %vm855 = vcmask 785408
      %v856 = vsel %vm855, %v852, %v854
      %v859 = vsel %vm855, 0.0, %v852
      %861 = vset.pattern.permute.xlu0 0
      %862 = vperm.xlu0 %861, %v605
      %v863 = vpop.permute.xlu0 %862
      %v865 = vmul.f32 %v863, %v859
      %v866 = vmul.f32 %v863, %v856
      %v867 = vadd.f32 %v847, %v865
      %v868 = vadd.f32 %v848, %v866
      %869 = vrot.lane.b32.xlu0 %v840, 32
      %v870 = vpop.permute.xlu0 %869
      %871 = vrot.lane.b32.xlu0 %v841, 32
      %v872 = vpop.permute.xlu0 %871
      %vm873 = vcmask 261120
      %v874 = vsel %vm873, %v870, %v872
      %v877 = vsel %vm873, %v872, 0.0
      %879 = vset.pattern.permute.xlu0 0
      %880 = vperm.xlu0 %879, %v607
      %v881 = vpop.permute.xlu0 %880
      %v883 = vmul.f32 %v881, %v874
      %v884 = vmul.f32 %v881, %v877
      %v885 = vadd.f32 %v867, %v883
      %v886 = vadd.f32 %v868, %v884
      %888 = vset.pattern.permute.xlu0 0
      %889 = vperm.xlu0 %888, %v585
      %v890 = vpop.permute.xlu0 %889
      %v892 = vmul.f32 %v885, %v890
      %v893 = vmul.f32 %v886, %v890
      %895 = vset.pattern.permute.xlu0 0
      %896 = vperm.xlu0 %895, %v589
      %v897 = vpop.permute.xlu0 %896
      %v899 = vadd.f32 %v892, %v897
      %v900 = vadd.f32 %v893, %v897
      %vm901 = vcmp.gt.f32.partialorder %v899, 0.0
      %vm902 = vcmp.gt.f32.partialorder %v900, 0.0
      %v903 = vmul.f32 %v899, 0.1
      %v904 = vmul.f32 %v900, 0.1
      %v905 = vsel %vm901, %v899, %v903
      %v906 = vsel %vm902, %v900, %v904
      %908 = vset.pattern.permute.xlu0 0
      %909 = vperm.xlu0 %908, %v616
      %v910 = vpop.permute.xlu0 %909
      %v912 = vmul.f32 %v910, %v905
      %v913 = vmul.f32 %v910, %v906
      %916 = vrot.lane.b32.xlu0 %v905, 6
      %v917 = vpop.permute.xlu0 %916
      %918 = vrot.lane.b32.xlu0 %v906, 6
      %v919 = vpop.permute.xlu0 %918
      %vm920 = vcmask 48128
      %v921 = vsel %vm920, %v917, %v919
      %v924 = vsel %vm920, 0.0, %v917
      %v926 = vlaneseq
      %v927 = vshrl.u32 %v926, 7
      %v928 = vsub.s32 0, %v927
      %v929 = vrot.slane %v470, %v928
      %v930 = vlaneseq
      %v931 = vshrl.u32 %v930, 7
      %v932 = vsub.s32 2, %v931
      %v933 = vrot.slane %v470, %v932
      %v936 = vlaneseq
      %v937 = vshrl.u32 %v936, 7
      %v938 = vsub.s32 0, %v937
      %v939 = vrot.slane %v929, %v938
      %v940 = vlaneseq
      %v941 = vshrl.u32 %v940, 7
      %v942 = vsub.s32 0, %v941
      %v943 = vrot.slane %v933, %v942
      %v944 = vmul.f32 %v924, %v939
      %v945 = vmul.f32 %v921, %v943
      %947 = vset.pattern.permute.xlu0 0
      %948 = vperm.xlu0 %947, %v615
      %v949 = vpop.permute.xlu0 %948
      %v951 = vmul.f32 %v949, %v944
      %v952 = vmul.f32 %v949, %v945
      %v953 = vadd.f32 %v912, %v951
      %v954 = vadd.f32 %v913, %v952
      %955 = vrot.lane.b32.xlu0 %v905, 122
      %v956 = vpop.permute.xlu0 %955
      %957 = vrot.lane.b32.xlu0 %v906, 122
      %v958 = vpop.permute.xlu0 %957
      %vm959 = vcmask 998400
      %v960 = vsel %vm959, %v956, %v958
      %v963 = vsel %vm959, %v958, 0.0
      %v964 = vlaneseq
      %v965 = vshrl.u32 %v964, 7
      %v966 = vsub.s32 1, %v965
      %v967 = vrot.slane %v470, %v966
      %v968 = vlaneseq
      %v969 = vshrl.u32 %v968, 7
      %v970 = vsub.s32 3, %v969
      %v971 = vrot.slane %v470, %v970
      %v974 = vlaneseq
      %v975 = vshrl.u32 %v974, 7
      %v976 = vsub.s32 1, %v975
      %v977 = vrot.slane %v967, %v976
      %v978 = vlaneseq
      %v979 = vshrl.u32 %v978, 7
      %v980 = vsub.s32 1, %v979
      %v981 = vrot.slane %v971, %v980
      %v982 = vmul.f32 %v960, %v977
      %v983 = vmul.f32 %v963, %v981
      %985 = vset.pattern.permute.xlu0 0
      %986 = vperm.xlu0 %985, %v617
      %v987 = vpop.permute.xlu0 %986
      %v989 = vmul.f32 %v987, %v982
      %v990 = vmul.f32 %v987, %v983
      %v991 = vadd.f32 %v953, %v989
      %v992 = vadd.f32 %v954, %v990
      %994 = vset.pattern.permute.xlu0 0
      %995 = vperm.xlu0 %994, %v593
      %v996 = vpop.permute.xlu0 %995
      %v998 = vmul.f32 %v991, %v996
      %v999 = vmul.f32 %v992, %v996
      %1001 = vset.pattern.permute.xlu0 0
      %1002 = vperm.xlu0 %1001, %v598
      %v1003 = vpop.permute.xlu0 %1002
      %v1005 = vadd.f32 %v998, %v1003
      %v1006 = vadd.f32 %v999, %v1003
      %vm1007 = vcmp.gt.f32.partialorder %v1005, 0.0
      %vm1008 = vcmp.gt.f32.partialorder %v1006, 0.0
      %v1009 = vmul.f32 %v1005, 0.1
      %v1010 = vmul.f32 %v1006, 0.1
      %v1011 = vsel %vm1007, %v1005, %v1009
      %v1012 = vsel %vm1008, %v1006, %v1010
      %1014 = vset.pattern.permute.xlu0 0
      %1015 = vperm.xlu0 %1014, %v574
      %v1016 = vpop.permute.xlu0 %1015
      %v1018 = vmul.f32 %v568, %v1016
      %v1019 = vmul.f32 %v570, %v1016
      %1021 = vset.pattern.permute.xlu0 0
      %1022 = vperm.xlu0 %1021, %v580
      %v1023 = vpop.permute.xlu0 %1022
      %v1025 = vadd.f32 %v1018, %v1023
      %v1026 = vadd.f32 %v1019, %v1023
      %vm1027 = vcmp.gt.f32.partialorder %v1025, 0.0
      %vm1028 = vcmp.gt.f32.partialorder %v1026, 0.0
      %v1029 = vmul.f32 %v1025, 0.1
      %v1030 = vmul.f32 %v1026, 0.1
      %v1031 = vsel %vm1027, %v1025, %v1029
      %v1032 = vsel %vm1028, %v1026, %v1030
      %1034 = vset.pattern.permute.xlu0 0
      %1035 = vperm.xlu0 %1034, %v609
      %v1036 = vpop.permute.xlu0 %1035
      %v1038 = vmul.f32 %v1036, %v1031
      %v1039 = vmul.f32 %v1036, %v1032
      %1041 = vrot.lane.b32.xlu0 %v1031, 64
      %v1042 = vpop.permute.xlu0 %1041
      %vm1044 = vcmask 523264
      %v1045 = vsel %vm1044, 0.0, %v1042
      %1047 = vset.pattern.permute.xlu0 0
      %1048 = vperm.xlu0 %1047, %v608
      %v1049 = vpop.permute.xlu0 %1048
      %v1051 = vmul.f32 %v1049, 0.0
      %v1052 = vmul.f32 %v1049, %v1045
      %v1053 = vadd.f32 %v1038, %v1051
      %v1054 = vadd.f32 %v1039, %v1052
      %1056 = vrot.lane.b32.xlu0 %v1032, 64
      %v1057 = vpop.permute.xlu0 %1056
      %v1059 = vsel %vm1044, %v1057, 0.0
      %1061 = vset.pattern.permute.xlu0 0
      %1062 = vperm.xlu0 %1061, %v610
      %v1063 = vpop.permute.xlu0 %1062
      %v1065 = vmul.f32 %v1063, %v1059
      %v1066 = vmul.f32 %v1063, 0.0
      %v1067 = vadd.f32 %v1053, %v1065
      %v1068 = vadd.f32 %v1054, %v1066
      %1070 = vset.pattern.permute.xlu0 0
      %1071 = vperm.xlu0 %1070, %v586
      %v1072 = vpop.permute.xlu0 %1071
      %v1074 = vmul.f32 %v1067, %v1072
      %v1075 = vmul.f32 %v1068, %v1072
      %1077 = vset.pattern.permute.xlu0 0
      %1078 = vperm.xlu0 %1077, %v590
      %v1079 = vpop.permute.xlu0 %1078
      %v1081 = vadd.f32 %v1074, %v1079
      %v1082 = vadd.f32 %v1075, %v1079
      %vm1083 = vcmp.gt.f32.partialorder %v1081, 0.0
      %vm1084 = vcmp.gt.f32.partialorder %v1082, 0.0
      %v1085 = vmul.f32 %v1081, 0.1
      %v1086 = vmul.f32 %v1082, 0.1
      %v1087 = vsel %vm1083, %v1081, %v1085
      %v1088 = vsel %vm1084, %v1082, %v1086
      %1090 = vset.pattern.permute.xlu0 0
      %1091 = vperm.xlu0 %1090, %v619
      %v1092 = vpop.permute.xlu0 %1091
      %v1094 = vmul.f32 %v1092, %v1087
      %v1095 = vmul.f32 %v1092, %v1088
      %1098 = vrot.lane.b32.xlu0 %v1087, 12
      %v1099 = vpop.permute.xlu0 %1098
      %1100 = vrot.lane.b32.xlu0 %v1088, 12
      %v1101 = vpop.permute.xlu0 %1100
      %vm1102 = vcmask 97280
      %v1103 = vsel %vm1102, %v1099, %v1101
      %v1106 = vsel %vm1102, 0.0, %v1099
      %v1108 = vlaneseq
      %v1109 = vshrl.u32 %v1108, 7
      %v1110 = vsub.s32 0, %v1109
      %v1111 = vrot.slane %v471, %v1110
      %v1112 = vlaneseq
      %v1113 = vshrl.u32 %v1112, 7
      %v1114 = vsub.s32 2, %v1113
      %v1115 = vrot.slane %v471, %v1114
      %v1118 = vlaneseq
      %v1119 = vshrl.u32 %v1118, 7
      %v1120 = vsub.s32 0, %v1119
      %v1121 = vrot.slane %v1111, %v1120
      %v1122 = vlaneseq
      %v1123 = vshrl.u32 %v1122, 7
      %v1124 = vsub.s32 0, %v1123
      %v1125 = vrot.slane %v1115, %v1124
      %v1126 = vmul.f32 %v1106, %v1121
      %v1127 = vmul.f32 %v1103, %v1125
      %1129 = vset.pattern.permute.xlu0 0
      %1130 = vperm.xlu0 %1129, %v618
      %v1131 = vpop.permute.xlu0 %1130
      %v1133 = vmul.f32 %v1131, %v1126
      %v1134 = vmul.f32 %v1131, %v1127
      %v1135 = vadd.f32 %v1094, %v1133
      %v1136 = vadd.f32 %v1095, %v1134
      %1137 = vrot.lane.b32.xlu0 %v1087, 116
      %v1138 = vpop.permute.xlu0 %1137
      %1139 = vrot.lane.b32.xlu0 %v1088, 116
      %v1140 = vpop.permute.xlu0 %1139
      %vm1141 = vcmask 949248
      %v1142 = vsel %vm1141, %v1138, %v1140
      %v1145 = vsel %vm1141, %v1140, 0.0
      %v1146 = vlaneseq
      %v1147 = vshrl.u32 %v1146, 7
      %v1148 = vsub.s32 1, %v1147
      %v1149 = vrot.slane %v471, %v1148
      %v1150 = vlaneseq
      %v1151 = vshrl.u32 %v1150, 7
      %v1152 = vsub.s32 3, %v1151
      %v1153 = vrot.slane %v471, %v1152
      %v1156 = vlaneseq
      %v1157 = vshrl.u32 %v1156, 7
      %v1158 = vsub.s32 1, %v1157
      %v1159 = vrot.slane %v1149, %v1158
      %v1160 = vlaneseq
      %v1161 = vshrl.u32 %v1160, 7
      %v1162 = vsub.s32 1, %v1161
      %v1163 = vrot.slane %v1153, %v1162
      %v1164 = vmul.f32 %v1142, %v1159
      %v1165 = vmul.f32 %v1145, %v1163
      %1167 = vset.pattern.permute.xlu0 0
      %1168 = vperm.xlu0 %1167, %v620
      %v1169 = vpop.permute.xlu0 %1168
      %v1171 = vmul.f32 %v1169, %v1164
      %v1172 = vmul.f32 %v1169, %v1165
      %v1173 = vadd.f32 %v1135, %v1171
      %v1174 = vadd.f32 %v1136, %v1172
      %1176 = vset.pattern.permute.xlu0 0
      %1177 = vperm.xlu0 %1176, %v594
      %v1178 = vpop.permute.xlu0 %1177
      %v1180 = vmul.f32 %v1173, %v1178
      %v1181 = vmul.f32 %v1174, %v1178
      %1183 = vset.pattern.permute.xlu0 0
      %1184 = vperm.xlu0 %1183, %v599
      %v1185 = vpop.permute.xlu0 %1184
      %v1187 = vadd.f32 %v1180, %v1185
      %v1188 = vadd.f32 %v1181, %v1185
      %vm1189 = vcmp.gt.f32.partialorder %v1187, 0.0
      %vm1190 = vcmp.gt.f32.partialorder %v1188, 0.0
      %v1191 = vmul.f32 %v1187, 0.1
      %v1192 = vmul.f32 %v1188, 0.1
      %v1193 = vsel %vm1189, %v1187, %v1191
      %v1194 = vsel %vm1190, %v1188, %v1192
      %1196 = vset.pattern.permute.xlu0 0
      %1197 = vperm.xlu0 %1196, %v575
      %v1198 = vpop.permute.xlu0 %1197
      %v1200 = vmul.f32 %v568, %v1198
      %v1201 = vmul.f32 %v570, %v1198
      %1203 = vset.pattern.permute.xlu0 0
      %1204 = vperm.xlu0 %1203, %v581
      %v1205 = vpop.permute.xlu0 %1204
      %v1207 = vadd.f32 %v1200, %v1205
      %v1208 = vadd.f32 %v1201, %v1205
      %vm1209 = vcmp.gt.f32.partialorder %v1207, 0.0
      %vm1210 = vcmp.gt.f32.partialorder %v1208, 0.0
      %v1211 = vmul.f32 %v1207, 0.1
      %v1212 = vmul.f32 %v1208, 0.1
      %v1213 = vsel %vm1209, %v1207, %v1211
      %v1214 = vsel %vm1210, %v1208, %v1212
      %1216 = vset.pattern.permute.xlu0 0
      %1217 = vperm.xlu0 %1216, %v611
      %v1218 = vpop.permute.xlu0 %1217
      %v1220 = vmul.f32 %v1218, %v1213
      %v1221 = vmul.f32 %v1218, %v1214
      %1223 = vset.pattern.permute.xlu0 0
      %1224 = vperm.xlu0 %1223, %v587
      %v1225 = vpop.permute.xlu0 %1224
      %v1227 = vmul.f32 %v1220, %v1225
      %v1228 = vmul.f32 %v1221, %v1225
      %1230 = vset.pattern.permute.xlu0 0
      %1231 = vperm.xlu0 %1230, %v591
      %v1232 = vpop.permute.xlu0 %1231
      %v1234 = vadd.f32 %v1227, %v1232
      %v1235 = vadd.f32 %v1228, %v1232
      %vm1236 = vcmp.gt.f32.partialorder %v1234, 0.0
      %vm1237 = vcmp.gt.f32.partialorder %v1235, 0.0
      %v1238 = vmul.f32 %v1234, 0.1
      %v1239 = vmul.f32 %v1235, 0.1
      %v1240 = vsel %vm1236, %v1234, %v1238
      %v1241 = vsel %vm1237, %v1235, %v1239
      %1243 = vset.pattern.permute.xlu0 0
      %1244 = vperm.xlu0 %1243, %v621
      %v1245 = vpop.permute.xlu0 %1244
      %v1247 = vmul.f32 %v1245, %v1240
      %v1248 = vmul.f32 %v1245, %v1241
      %1250 = vset.pattern.permute.xlu0 0
      %1251 = vperm.xlu0 %1250, %v595
      %v1252 = vpop.permute.xlu0 %1251
      %v1254 = vmul.f32 %v1247, %v1252
      %v1255 = vmul.f32 %v1248, %v1252
      %1257 = vset.pattern.permute.xlu0 0
      %1258 = vperm.xlu0 %1257, %v600
      %v1259 = vpop.permute.xlu0 %1258
      %v1261 = vadd.f32 %v1254, %v1259
      %v1262 = vadd.f32 %v1255, %v1259
      %vm1263 = vcmp.gt.f32.partialorder %v1261, 0.0
      %vm1264 = vcmp.gt.f32.partialorder %v1262, 0.0
      %v1265 = vmul.f32 %v1261, 0.1
      %v1266 = vmul.f32 %v1262, 0.1
      %v1267 = vsel %vm1263, %v1261, %v1265
      %v1268 = vsel %vm1264, %v1262, %v1266
      %1270 = vset.pattern.permute.xlu0 0
      %1271 = vperm.xlu0 %1270, %v576
      %v1272 = vpop.permute.xlu0 %1271
      %v1274 = vmul.f32 %v568, %v1272
      %v1275 = vmul.f32 %v570, %v1272
      %1277 = vset.pattern.permute.xlu0 0
      %1278 = vperm.xlu0 %1277, %v582
      %v1279 = vpop.permute.xlu0 %1278
      %v1281 = vadd.f32 %v1274, %v1279
      %v1282 = vadd.f32 %v1275, %v1279
      %vm1283 = vcmp.gt.f32.partialorder %v1281, 0.0
      %vm1284 = vcmp.gt.f32.partialorder %v1282, 0.0
      %v1285 = vmul.f32 %v1281, 0.1
      %v1286 = vmul.f32 %v1282, 0.1
      %v1287 = vsel %vm1283, %v1281, %v1285
      %v1288 = vsel %vm1284, %v1282, %v1286
      %1291 = vrot.lane.b32.xlu0 %v1287, 17
      %v1292 = vpop.permute.xlu0 %1291
      %1293 = vrot.lane.b32.xlu0 %v1288, 17
      %v1294 = vpop.permute.xlu0 %1293
      %vm1295 = vcmask 138240
      %v1296 = vsel %vm1295, %v1292, %v1294
      %v1299 = vsel %vm1295, 0.0, %v1292
      %v1301 = vlaneseq
      %v1302 = vshrl.u32 %v1301, 7
      %v1303 = vsub.s32 0, %v1302
      %v1304 = vrot.slane %v468, %v1303
      %v1305 = vlaneseq
      %v1306 = vshrl.u32 %v1305, 7
      %v1307 = vsub.s32 2, %v1306
      %v1308 = vrot.slane %v468, %v1307
      %v1311 = vlaneseq
      %v1312 = vshrl.u32 %v1311, 7
      %v1313 = vsub.s32 0, %v1312
      %v1314 = vrot.slane %v1304, %v1313
      %v1315 = vlaneseq
      %v1316 = vshrl.u32 %v1315, 7
      %v1317 = vsub.s32 0, %v1316
      %v1318 = vrot.slane %v1308, %v1317
      %v1319 = vmul.f32 %v1299, %v1314
      %v1320 = vmul.f32 %v1296, %v1318
      %1322 = vset.pattern.permute.xlu0 0
      %1323 = vperm.xlu0 %1322, %v622
      %v1324 = vpop.permute.xlu0 %1323
      %v1326 = vmul.f32 %v1324, %v1319
      %v1327 = vmul.f32 %v1324, %v1320
      %1328 = vrot.lane.b32.xlu0 %v1287, 16
      %v1329 = vpop.permute.xlu0 %1328
      %1330 = vrot.lane.b32.xlu0 %v1288, 16
      %v1331 = vpop.permute.xlu0 %1330
      %vm1332 = vcmask 130048
      %v1333 = vsel %vm1332, %v1329, %v1331
      %v1336 = vsel %vm1332, 0.0, %v1329
      %1338 = vset.pattern.permute.xlu0 0
      %1339 = vperm.xlu0 %1338, %v623
      %v1340 = vpop.permute.xlu0 %1339
      %v1342 = vmul.f32 %v1340, %v1336
      %v1343 = vmul.f32 %v1340, %v1333
      %1344 = vrot.lane.b32.xlu0 %v1287, 15
      %v1345 = vpop.permute.xlu0 %1344
      %1346 = vrot.lane.b32.xlu0 %v1288, 15
      %v1347 = vpop.permute.xlu0 %1346
      %vm1348 = vcmask 121856
      %v1349 = vsel %vm1348, %v1345, %v1347
      %v1352 = vsel %vm1348, 0.0, %v1345
      %v1353 = vlaneseq
      %v1354 = vshrl.u32 %v1353, 7
      %v1355 = vsub.s32 1, %v1354
      %v1356 = vrot.slane %v468, %v1355
      %v1357 = vlaneseq
      %v1358 = vshrl.u32 %v1357, 7
      %v1359 = vsub.s32 3, %v1358
      %v1360 = vrot.slane %v468, %v1359
      %v1363 = vlaneseq
      %v1364 = vshrl.u32 %v1363, 7
      %v1365 = vsub.s32 1, %v1364
      %v1366 = vrot.slane %v1356, %v1365
      %v1367 = vlaneseq
      %v1368 = vshrl.u32 %v1367, 7
      %v1369 = vsub.s32 1, %v1368
      %v1370 = vrot.slane %v1360, %v1369
      %v1371 = vmul.f32 %v1352, %v1366
      %v1372 = vmul.f32 %v1349, %v1370
      %1374 = vset.pattern.permute.xlu0 0
      %1375 = vperm.xlu0 %1374, %v624
      %v1376 = vpop.permute.xlu0 %1375
      %v1378 = vmul.f32 %v1376, %v1371
      %v1379 = vmul.f32 %v1376, %v1372
      %1380 = vrot.lane.b32.xlu0 %v1287, 1
      %v1381 = vpop.permute.xlu0 %1380
      %1382 = vrot.lane.b32.xlu0 %v1288, 1
      %v1383 = vpop.permute.xlu0 %1382
      %vm1384 = vcmask 7168
      %v1385 = vsel %vm1384, %v1381, %v1383
      %v1388 = vsel %vm1384, 0.0, %v1381
      %v1389 = vmul.f32 %v1388, %v1314
      %v1390 = vmul.f32 %v1385, %v1318
      %1392 = vset.pattern.permute.xlu0 0
      %1393 = vperm.xlu0 %1392, %v625
      %v1394 = vpop.permute.xlu0 %1393
      %v1396 = vmul.f32 %v1394, %v1389
      %v1397 = vmul.f32 %v1394, %v1390
      %1399 = vset.pattern.permute.xlu0 0
      %1400 = vperm.xlu0 %1399, %v626
      %v1401 = vpop.permute.xlu0 %1400
      %v1403 = vmul.f32 %v1401, %v1287
      %v1404 = vmul.f32 %v1401, %v1288
      %1405 = vrot.lane.b32.xlu0 %v1287, 127
      %v1406 = vpop.permute.xlu0 %1405
      %1407 = vrot.lane.b32.xlu0 %v1288, 127
      %v1408 = vpop.permute.xlu0 %1407
      %vm1409 = vcmask 1039360
      %v1410 = vsel %vm1409, %v1406, %v1408
      %v1413 = vsel %vm1409, %v1408, 0.0
      %v1414 = vmul.f32 %v1410, %v1366
      %v1415 = vmul.f32 %v1413, %v1370
      %1417 = vset.pattern.permute.xlu0 0
      %1418 = vperm.xlu0 %1417, %v627
      %v1419 = vpop.permute.xlu0 %1418
      %v1421 = vmul.f32 %v1419, %v1414
      %v1422 = vmul.f32 %v1419, %v1415
      %1423 = vrot.lane.b32.xlu0 %v1287, 113
      %v1424 = vpop.permute.xlu0 %1423
      %1425 = vrot.lane.b32.xlu0 %v1288, 113
      %v1426 = vpop.permute.xlu0 %1425
      %vm1427 = vcmask 924672
      %v1428 = vsel %vm1427, %v1424, %v1426
      %v1431 = vsel %vm1427, %v1426, 0.0
      %v1432 = vmul.f32 %v1428, %v1314
      %v1433 = vmul.f32 %v1431, %v1318
      %1435 = vset.pattern.permute.xlu0 0
      %1436 = vperm.xlu0 %1435, %v628
      %v1437 = vpop.permute.xlu0 %1436
      %v1439 = vmul.f32 %v1437, %v1432
      %v1440 = vmul.f32 %v1437, %v1433
      %1441 = vrot.lane.b32.xlu0 %v1287, 112
      %v1442 = vpop.permute.xlu0 %1441
      %1443 = vrot.lane.b32.xlu0 %v1288, 112
      %v1444 = vpop.permute.xlu0 %1443
      %vm1445 = vcmask 916480
      %v1446 = vsel %vm1445, %v1442, %v1444
      %v1449 = vsel %vm1445, %v1444, 0.0
      %1451 = vset.pattern.permute.xlu0 0
      %1452 = vperm.xlu0 %1451, %v629
      %v1453 = vpop.permute.xlu0 %1452
      %v1455 = vmul.f32 %v1453, %v1446
      %v1456 = vmul.f32 %v1453, %v1449
      %1457 = vrot.lane.b32.xlu0 %v1287, 111
      %v1458 = vpop.permute.xlu0 %1457
      %1459 = vrot.lane.b32.xlu0 %v1288, 111
      %v1460 = vpop.permute.xlu0 %1459
      %vm1461 = vcmask 908288
      %v1462 = vsel %vm1461, %v1458, %v1460
      %v1465 = vsel %vm1461, %v1460, 0.0
      %v1466 = vmul.f32 %v1462, %v1366
      %v1467 = vmul.f32 %v1465, %v1370
      %1469 = vset.pattern.permute.xlu0 0
      %1470 = vperm.xlu0 %1469, %v630
      %v1471 = vpop.permute.xlu0 %1470
      %v1473 = vmul.f32 %v1471, %v1466
      %v1474 = vmul.f32 %v1471, %v1467
      %v1475 = vadd.f32 %v1326, %v1342
      %v1476 = vadd.f32 %v1327, %v1343
      %v1477 = vadd.f32 %v1475, %v1378
      %v1478 = vadd.f32 %v1476, %v1379
      %v1479 = vadd.f32 %v1477, %v1396
      %v1480 = vadd.f32 %v1478, %v1397
      %v1481 = vadd.f32 %v1479, %v1403
      %v1482 = vadd.f32 %v1480, %v1404
      %v1483 = vadd.f32 %v1481, %v1421
      %v1484 = vadd.f32 %v1482, %v1422
      %v1485 = vadd.f32 %v1483, %v1439
      %v1486 = vadd.f32 %v1484, %v1440
      %v1487 = vadd.f32 %v1485, %v1455
      %v1488 = vadd.f32 %v1486, %v1456
      %v1489 = vadd.f32 %v1487, %v1473
      %v1490 = vadd.f32 %v1488, %v1474
      %1492 = vset.pattern.permute.xlu0 0
      %1493 = vperm.xlu0 %1492, %v596
      %v1494 = vpop.permute.xlu0 %1493
      %v1496 = vmul.f32 %v1489, %v1494
      %v1497 = vmul.f32 %v1490, %v1494
      %1499 = vset.pattern.permute.xlu0 0
      %1500 = vperm.xlu0 %1499, %v601
      %v1501 = vpop.permute.xlu0 %1500
      %v1503 = vadd.f32 %v1496, %v1501
      %v1504 = vadd.f32 %v1497, %v1501
      %vm1505 = vcmp.gt.f32.partialorder %v1503, 0.0
      %vm1506 = vcmp.gt.f32.partialorder %v1504, 0.0
      %v1507 = vmul.f32 %v1503, 0.1
      %v1508 = vmul.f32 %v1504, 0.1
      %v1509 = vsel %vm1505, %v1503, %v1507
      %v1510 = vsel %vm1506, %v1504, %v1508
      %1512 = vset.pattern.permute.xlu0 0
      %1513 = vperm.xlu0 %1512, %v577
      %v1514 = vpop.permute.xlu0 %1513
      %v1516 = vmul.f32 %v568, %v1514
      %v1517 = vmul.f32 %v570, %v1514
      %1519 = vset.pattern.permute.xlu0 0
      %1520 = vperm.xlu0 %1519, %v583
      %v1521 = vpop.permute.xlu0 %1520
      %v1523 = vadd.f32 %v1516, %v1521
      %v1524 = vadd.f32 %v1517, %v1521
      %vm1525 = vcmp.gt.f32.partialorder %v1523, 0.0
      %vm1526 = vcmp.gt.f32.partialorder %v1524, 0.0
      %v1527 = vmul.f32 %v1523, 0.1
      %v1528 = vmul.f32 %v1524, 0.1
      %v1529 = vsel %vm1525, %v1523, %v1527
      %v1530 = vsel %vm1526, %v1524, %v1528
      %v1531 = vadd.f32 %v1529, %v1530
      %1532 = vadd.xlane.f32.xlu0 %v1531
      %v1533 = vpop.xlane.xlu0 %1532
      %v1534 = vmul.f32 %v1533, 0.00390625
      %v1535 = vld [vmem:[%s12] sm:$0xff]
      %v1536 = vld [vmem:[%s12 + $0x8] sm:$0xff]
      %v1537 = vld [vmem:[%s12 + $0x10] sm:$0xff]
      %v1538 = vld [vmem:[%s12 + $0x18] sm:$0xff]
      %v1539 = vld [vmem:[%s12 + $0x20] sm:$0xff]
      %v1540 = vld [vmem:[%s12 + $0x28] sm:$0xff]
      %v1541 = vld [vmem:[%s12 + $0x30] sm:$0xff]
      %v1542 = vld [vmem:[%s12 + $0x38] sm:$0xff]
      %v1543 = vld [vmem:[%s12 + $0x40] sm:$0xff]
      %v1544 = vld [vmem:[%s12 + $0x48] sm:$0xff]
      %v1545 = vld [vmem:[%s12 + $0x50] sm:$0xff]
      %v1546 = vld [vmem:[%s12 + $0x58] sm:$0xff]
      %v1547 = vld [vmem:[%s12 + $0x60] sm:$0xff]
      %v1548 = vld [vmem:[%s12 + $0x68] sm:$0xff]
      %v1549 = vld [vmem:[%s12 + $0x70] sm:$0xff]
      %v1550 = vld [vmem:[%s12 + $0x78] sm:$0xff]
      %v1552 = vsel %vm664, %v1535, 0
      %v1555 = vsel %vm664, %v1536, 0
      %v1558 = vsel %vm664, %v1537, 0
      %v1561 = vsel %vm664, %v1538, 0
      %v1564 = vsel %vm664, %v1539, 0
      %v1567 = vsel %vm664, %v1540, 0
      %v1570 = vsel %vm664, %v1541, 0
      %v1573 = vsel %vm664, %v1542, 0
      %v1576 = vsel %vm664, %v1543, 0
      %v1579 = vsel %vm664, %v1544, 0
      %v1582 = vsel %vm664, %v1545, 0
      %v1585 = vsel %vm664, %v1546, 0
      %v1588 = vsel %vm664, %v1547, 0
      %v1591 = vsel %vm664, %v1548, 0
      %v1594 = vsel %vm664, %v1549, 0
      %v1597 = vsel %vm664, %v1550, 0
      %1599 = vmatprep.subr.mxu0 %v821
      %1600 = vmatpush1.msra.mxu0 %v820
      %1601 = vmatprep.subr.mxu0 %v1012
      %1602 = vmatpush1.msra.mxu0 %v1011
      %1603 = vmatprep.subr.mxu0 %v1194
      %1604 = vmatpush1.msra.mxu0 %v1193
      %1605 = vmatprep.subr.mxu0 %v1268
      %1606 = vmatpush1.msra.mxu0 %v1267
      %1607 = vmatprep.subr.mxu0 %v1510
      %1608 = vmatpush1.msra.mxu0 %v1509
      %1609 = vmatprep.subr.mxu0 %v1534
      %1610 = vmatpush1.msra.mxu0 %v1534
      %1611 = vmatprep.subr.mxu0 0.0
      %1612 = vmatpush1.msra.mxu0 0.0
      %1613 = vmatprep.subr.mxu0 0.0
      %1614 = vmatpush1.msra.mxu0 0.0
      %1615 = vmatprep.subr.mxu0 0.0
      %1616 = vmatpush1.msra.mxu0 0.0
      %1617 = vmatprep.subr.mxu0 0.0
      %1618 = vmatpush1.msra.mxu0 0.0
      %1619 = vmatprep.subr.mxu0 0.0
      %1620 = vmatpush1.msra.mxu0 0.0
      %1621 = vmatprep.subr.mxu0 0.0
      %1622 = vmatpush1.msra.mxu0 0.0
      %1623 = vmatprep.subr.mxu0 0.0
      %1624 = vmatpush1.msra.mxu0 0.0
      %1625 = vmatprep.subr.mxu0 0.0
      %1626 = vmatpush1.msra.mxu0 0.0
      %1627 = vmatprep.subr.mxu0 0.0
      %1628 = vmatpush1.msra.mxu0 0.0
      %1629 = vmatprep.subr.mxu0 0.0
      %1630 = vmatpush1.msra.mxu0 0.0
      %1631 = vmatprep.subr.mxu0 0.0
      %1632 = vmatpush1.msra.mxu0 0.0
      %1633 = vmatprep.subr.mxu0 0.0
      %1634 = vmatpush1.msra.mxu0 0.0
      %1635 = vmatprep.subr.mxu0 0.0
      %1636 = vmatpush1.msra.mxu0 0.0
      %1637 = vmatprep.subr.mxu0 0.0
      %1638 = vmatpush1.msra.mxu0 0.0
      %1639 = vmatprep.subr.mxu0 0.0
      %1640 = vmatpush1.msra.mxu0 0.0
      %1641 = vmatprep.subr.mxu0 0.0
      %1642 = vmatpush1.msra.mxu0 0.0
      %1643 = vmatprep.subr.mxu0 0.0
      %1644 = vmatpush1.msra.mxu0 0.0
      %1645 = vmatprep.subr.mxu0 0.0
      %1646 = vmatpush1.msra.mxu0 0.0
      %1647 = vmatprep.subr.mxu0 0.0
      %1648 = vmatpush1.msra.mxu0 0.0
      %1649 = vmatprep.subr.mxu0 0.0
      %1650 = vmatpush1.msra.mxu0 0.0
      %1651 = vmatprep.subr.mxu0 0.0
      %1652 = vmatpush1.msra.mxu0 0.0
      %1653 = vmatprep.subr.mxu0 0.0
      %1654 = vmatpush1.msra.mxu0 0.0
      %1655 = vmatprep.subr.mxu0 0.0
      %1656 = vmatpush1.msra.mxu0 0.0
      %1657 = vmatprep.subr.mxu0 0.0
      %1658 = vmatpush1.msra.mxu0 0.0
      %1659 = vmatprep.subr.mxu0 0.0
      %1660 = vmatpush1.msra.mxu0 0.0
      %1661 = vmatprep.subr.mxu0 0.0
      %1662 = vmatpush1.msra.mxu0 0.0
      %1663 = vmatprep.mubr.f32.mxu0 0.0
      %1664 = vmatmul.mubr.f32.gmra.mrb[0].mxu0 %v1552
      %v1665 = vpop.f32.mrb[0].mxu0
      %v1666 = vadd.f32 0.0, %v1665
      %v1667 = vpop.f32.mrb[0].mxu0
      %v1668 = vadd.f32 0.0, %v1667
      %1669 = vmatprep.mubr.f32.mxu0 0.0
      %1670 = vmatmul.mubr.f32.gmra.mrb[0].mxu0 %v1555
      %v1671 = vpop.f32.mrb[0].mxu0
      %v1672 = vadd.f32 0.0, %v1671
      %v1673 = vpop.f32.mrb[0].mxu0
      %v1674 = vadd.f32 0.0, %v1673
      %1675 = vmatprep.mubr.f32.mxu0 0.0
      %1676 = vmatmul.mubr.f32.gmra.mrb[0].mxu0 %v1558
      %v1677 = vpop.f32.mrb[0].mxu0
      %v1678 = vadd.f32 0.0, %v1677
      %v1679 = vpop.f32.mrb[0].mxu0
      %v1680 = vadd.f32 0.0, %v1679
      %1681 = vmatprep.mubr.f32.mxu0 0.0
      %1682 = vmatmul.mubr.f32.gmra.mrb[0].mxu0 %v1561
      %v1683 = vpop.f32.mrb[0].mxu0
      %v1684 = vadd.f32 0.0, %v1683
      %v1685 = vpop.f32.mrb[0].mxu0
      %v1686 = vadd.f32 0.0, %v1685
      %1687 = vmatprep.mubr.f32.mxu0 0.0
      %1688 = vmatmul.mubr.f32.gmra.mrb[0].mxu0 %v1564
      %v1689 = vpop.f32.mrb[0].mxu0
      %v1690 = vadd.f32 0.0, %v1689
      %v1691 = vpop.f32.mrb[0].mxu0
      %v1692 = vadd.f32 0.0, %v1691
      %1693 = vmatprep.mubr.f32.mxu0 0.0
      %1694 = vmatmul.mubr.f32.gmra.mrb[0].mxu0 %v1567
      %v1695 = vpop.f32.mrb[0].mxu0
      %v1696 = vadd.f32 0.0, %v1695
      %v1697 = vpop.f32.mrb[0].mxu0
      %v1698 = vadd.f32 0.0, %v1697
      %1699 = vmatprep.mubr.f32.mxu0 0.0
      %1700 = vmatmul.mubr.f32.gmra.mrb[0].mxu0 %v1570
      %v1701 = vpop.f32.mrb[0].mxu0
      %v1702 = vadd.f32 0.0, %v1701
      %v1703 = vpop.f32.mrb[0].mxu0
      %v1704 = vadd.f32 0.0, %v1703
      %1705 = vmatprep.mubr.f32.mxu0 0.0
      %1706 = vmatmul.mubr.f32.gmra.mrb[0].mxu0 %v1573
      %v1707 = vpop.f32.mrb[0].mxu0
      %v1708 = vadd.f32 0.0, %v1707
      %v1709 = vpop.f32.mrb[0].mxu0
      %v1710 = vadd.f32 0.0, %v1709
      %1711 = vmatprep.mubr.f32.mxu0 0.0
      %1712 = vmatmul.mubr.f32.gmra.mrb[0].mxu0 %v1576
      %v1713 = vpop.f32.mrb[0].mxu0
      %v1714 = vadd.f32 0.0, %v1713
      %v1715 = vpop.f32.mrb[0].mxu0
      %v1716 = vadd.f32 0.0, %v1715
      %1717 = vmatprep.mubr.f32.mxu0 0.0
      %1718 = vmatmul.mubr.f32.gmra.mrb[0].mxu0 %v1579
      %v1719 = vpop.f32.mrb[0].mxu0
      %v1720 = vadd.f32 0.0, %v1719
      %v1721 = vpop.f32.mrb[0].mxu0
      %v1722 = vadd.f32 0.0, %v1721
      %1723 = vmatprep.mubr.f32.mxu0 0.0
      %1724 = vmatmul.mubr.f32.gmra.mrb[0].mxu0 %v1582
      %v1725 = vpop.f32.mrb[0].mxu0
      %v1726 = vadd.f32 0.0, %v1725
      %v1727 = vpop.f32.mrb[0].mxu0
      %v1728 = vadd.f32 0.0, %v1727
      %1729 = vmatprep.mubr.f32.mxu0 0.0
      %1730 = vmatmul.mubr.f32.gmra.mrb[0].mxu0 %v1585
      %v1731 = vpop.f32.mrb[0].mxu0
      %v1732 = vadd.f32 0.0, %v1731
      %v1733 = vpop.f32.mrb[0].mxu0
      %v1734 = vadd.f32 0.0, %v1733
      %1735 = vmatprep.mubr.f32.mxu0 0.0
      %1736 = vmatmul.mubr.f32.gmra.mrb[0].mxu0 %v1588
      %v1737 = vpop.f32.mrb[0].mxu0
      %v1738 = vadd.f32 0.0, %v1737
      %v1739 = vpop.f32.mrb[0].mxu0
      %v1740 = vadd.f32 0.0, %v1739
      %1741 = vmatprep.mubr.f32.mxu0 0.0
      %1742 = vmatmul.mubr.f32.gmra.mrb[0].mxu0 %v1591
      %v1743 = vpop.f32.mrb[0].mxu0
      %v1744 = vadd.f32 0.0, %v1743
      %v1745 = vpop.f32.mrb[0].mxu0
      %v1746 = vadd.f32 0.0, %v1745
      %1747 = vmatprep.mubr.f32.mxu0 0.0
      %1748 = vmatmul.mubr.f32.gmra.mrb[0].mxu0 %v1594
      %v1749 = vpop.f32.mrb[0].mxu0
      %v1750 = vadd.f32 0.0, %v1749
      %v1751 = vpop.f32.mrb[0].mxu0
      %v1752 = vadd.f32 0.0, %v1751
      %1753 = vmatprep.mubr.f32.mxu0 0.0
      %1754 = vmatmul.mubr.f32.gmra.mrb[0].mxu0 %v1597
      %v1755 = vpop.f32.mrb[0].mxu0
      %v1756 = vadd.f32 0.0, %v1755
      %v1757 = vpop.f32.mrb[0].mxu0
      %v1758 = vadd.f32 0.0, %v1757
      %1759 = vdwg.mxu0
      %1760 = vst [vmem:[%s467] sm:$0xff] %v1666
      %1761 = vst [vmem:[%s467 + $0x8] sm:$0xff] %v1668
      %1762 = vst [vmem:[%s467 + $0x10] sm:$0xff] %v1672
      %1763 = vst [vmem:[%s467 + $0x18] sm:$0xff] %v1674
      %1764 = vst [vmem:[%s467 + $0x20] sm:$0xff] %v1678
      %1765 = vst [vmem:[%s467 + $0x28] sm:$0xff] %v1680
      %1766 = vst [vmem:[%s467 + $0x30] sm:$0xff] %v1684
      %1767 = vst [vmem:[%s467 + $0x38] sm:$0xff] %v1686
      %1768 = vst [vmem:[%s467 + $0x40] sm:$0xff] %v1690
      %1769 = vst [vmem:[%s467 + $0x48] sm:$0xff] %v1692
      %1770 = vst [vmem:[%s467 + $0x50] sm:$0xff] %v1696
      %1771 = vst [vmem:[%s467 + $0x58] sm:$0xff] %v1698
      %1772 = vst [vmem:[%s467 + $0x60] sm:$0xff] %v1702
      %1773 = vst [vmem:[%s467 + $0x68] sm:$0xff] %v1704
      %1774 = vst [vmem:[%s467 + $0x70] sm:$0xff] %v1708
      %1775 = vst [vmem:[%s467 + $0x78] sm:$0xff] %v1710
      %1776 = vst [vmem:[%s467 + $0x80] sm:$0xff] %v1714
      %1777 = vst [vmem:[%s467 + $0x88] sm:$0xff] %v1716
      %1778 = vst [vmem:[%s467 + $0x90] sm:$0xff] %v1720
      %1779 = vst [vmem:[%s467 + $0x98] sm:$0xff] %v1722
      %1780 = vst [vmem:[%s467 + $0xa0] sm:$0xff] %v1726
      %1781 = vst [vmem:[%s467 + $0xa8] sm:$0xff] %v1728
      %1782 = vst [vmem:[%s467 + $0xb0] sm:$0xff] %v1732
      %1783 = vst [vmem:[%s467 + $0xb8] sm:$0xff] %v1734
      %1784 = vst [vmem:[%s467 + $0xc0] sm:$0xff] %v1738
      %1785 = vst [vmem:[%s467 + $0xc8] sm:$0xff] %v1740
      %1786 = vst [vmem:[%s467 + $0xd0] sm:$0xff] %v1744
      %1787 = vst [vmem:[%s467 + $0xd8] sm:$0xff] %v1746
      %1788 = vst [vmem:[%s467 + $0xe0] sm:$0xff] %v1750
      %1789 = vst [vmem:[%s467 + $0xe8] sm:$0xff] %v1752
      %1790 = vst [vmem:[%s467 + $0xf0] sm:$0xff] %v1756
      %1791 = vst [vmem:[%s467 + $0xf8] sm:$0xff] %v1758
      %p1792 = scmp.lt.s32.totalorder %s25, 1
      %s1793 = scalar_select %p1792, %s25, 1
      %s1794 = smul.addr %s1793, 32
      %s1795 = smul.addr %s1794, 8
      %s1796 = scalar_lea.vmem %s14, %s1795
      // Predicated region
      $region77: #{rfblock_forward.1} parent=75 // pred_check
        %p1797 = pneg %p342
      $region78: #{rfblock_forward.1} parent=75 // pred_check_branch
        %1799 = sbr.rel (%p1797) target = $region80
      $region79: #{rfblock_forward.1} parent=75 // pred_region
        _
      $region80: #{rfblock_forward.1} parent=75 // pred_fallthru
        _
    $region76: #{rfblock_forward.1} parent=5 // pred_fallthru
      _
    %p1800 = scmp.le.s32.totalorder 2, %s20
    // Predicated region
    $region81: #{rfblock_forward.1} parent=5 // pred_check
      %p1801 = pneg %p1800
    $region82: #{rfblock_forward.1} parent=5 // pred_check_branch
      %1803 = sbr.rel (%p1801) target = $region84
    $region83: #{rfblock_forward.1} parent=5 // pred_region
      %s1804 = ssub.s32 %s20, 2
      // Predicated region
      $region85: #{rfblock_forward.1} parent=83 // pred_check
        %p1805 = pneg %p348
      $region86: #{rfblock_forward.1} parent=83 // pred_check_branch
        %1807 = sbr.rel (%p1805) target = $region88
      $region87: #{rfblock_forward.1} parent=83 // pred_region
        %p1808 = scmp.lt.s32.totalorder %s26, 1
        %s1809 = scalar_select %p1808, %s26, 1
        %s1810 = smul.addr %s1809, 32
        %s1811 = smul.addr %s1810, 8
        %s1812 = scalar_lea.vmem %s14, %s1811
      $region88: #{rfblock_forward.1} parent=83 // pred_fallthru
        _
    $region84: #{rfblock_forward.1} parent=5 // pred_fallthru
      _
  $region6: #{rfblock_forward.1} parent=0 // loop_footer
    %s24 = sadd.s32 1, %s20
  $region7: #{rfblock_forward.1} parent=0 // loop_footer_branch
    %19 = sbr.rel target = $region3
  $region8: #{rfblock_forward.1} parent=0 // loop_exit
    _

</llo_original>
